<compile_context>
chip_gen: v7x
topology: tpu7x:2x2x1
jax: 0.10.0
libtpu: 0.0.40
codegen_flags: <defaults>
</compile_context>

<pallas_src>
import functools

import jax
import jax.numpy as jnp
from jax.experimental import pallas as pl
from jax.experimental.pallas import tpu as pltpu


# ---------------------------------------------------------------------------
# Kernel 1: embedding gather + context mean
# ---------------------------------------------------------------------------
def _mean_kernel(idx_ref, emb_hbm, mean_ref, rows_buf, sem,
                 *, batch, context, vocab):
    """idx_ref  : (B, C) int32, SMEM (scalar prefetch)
       emb_hbm  : (V, E) f32, HBM (pl.ANY) -- rows gathered via manual DMA
       mean_ref : (B, E) f32, VMEM output
       rows_buf : (C, B, E) f32 VMEM scratch; rows_buf[c, b] = emb[idx[b, c]]
       sem      : single shared DMA semaphore (waited once per copy)
    """
    copies = []
    for c in range(context):
        for b in range(batch):
            tok = idx_ref[b, c]
            # Clamp untrusted ids (no runtime bounds check on TPU DMA refs).
            tok = jnp.minimum(jnp.maximum(tok, 0), vocab - 1)
            cp = pltpu.make_async_copy(
                emb_hbm.at[pl.ds(tok, 1), :],
                rows_buf.at[c, pl.ds(b, 1), :],
                sem,
            )
            cp.start()
            copies.append(cp)
    for cp in copies:
        cp.wait()

    # Mean over the context axis.  rows_buf is (C, B, E): each addend is a
    # full, sublane-aligned (B, E) tile -> pure VPU adds.
    acc = rows_buf[0]
    for c in range(1, context):
        acc = acc + rows_buf[c]
    mean_ref[...] = acc * jnp.float32(1.0 / context)


def embedding_context_mean(indices, emb_table):
    B, C = indices.shape
    V, E = emb_table.shape
    kernel = functools.partial(_mean_kernel, batch=B, context=C, vocab=V)
    return pl.pallas_call(
        kernel,
        out_shape=jax.ShapeDtypeStruct((B, E), jnp.float32),
        grid_spec=pltpu.PrefetchScalarGridSpec(
            num_scalar_prefetch=1,                       # indices -> SMEM
            grid=(1,),
            in_specs=[pl.BlockSpec(memory_space=pl.ANY)],  # emb table in HBM
            out_specs=pl.BlockSpec((B, E), lambda i, idx: (0, 0)),
            scratch_shapes=[
                pltpu.VMEM((C, B, E), jnp.float32),      # gathered rows
                pltpu.SemaphoreType.DMA,                 # one shared DMA sem
            ],
        ),
        compiler_params=pltpu.CompilerParams(
            dimension_semantics=("arbitrary",),
        ),
    )(indices, emb_table)


# ---------------------------------------------------------------------------
# Kernel 2: streamed, vocab-tiled linear layer
# ---------------------------------------------------------------------------
def _linear_kernel(mean_ref, w_ref, b_ref, out_ref):
    """mean_ref: (B, E) bf16 (resident across tiles)
       w_ref   : (E, TILE_V) bf16 streamed weight tile (W.T)
       b_ref   : (1, TILE_V) f32 bias tile
       out_ref : (B, TILE_V) f32 lane-dense output tile
    """
    acc = jnp.dot(mean_ref[...], w_ref[...],
                  preferred_element_type=jnp.float32)
    out_ref[...] = (acc + b_ref[...]).astype(out_ref.dtype)


def _choose_tile_v(V, E, dtype_bytes, vmem_weight_budget):
    # Biggest lane-aligned tile whose double-buffered weight slice fits the
    # budget, but keep >= 2 grid steps when possible so the "parallel" vocab
    # axis can be split across both v7x TensorCores.
    max_tile = max(128, (vmem_weight_budget // (2 * E * dtype_bytes)) // 128 * 128)
    v_pad128 = pl.cdiv(V, 128) * 128
    tile_v = min(max_tile, v_pad128)
    if tile_v >= 256 and pl.cdiv(v_pad128, tile_v) < 2:
        tile_v = (tile_v // 2) // 128 * 128
    v_pad = pl.cdiv(V, tile_v) * tile_v
    return tile_v, v_pad


def prepare_linear_params(weight, bias, *, vmem_weight_budget=4 << 20):
    """ONE-TIME parameter prep, hoisted out of the per-call forward path:
    transpose the torch-layout (V, E) weight to (E, V), zero-pad the vocab
    axis to a tile multiple, and cast to bf16 for streaming."""
    V, E = weight.shape
    tile_v, v_pad = _choose_tile_v(V, E, dtype_bytes=2,
                                   vmem_weight_budget=vmem_weight_budget)
    w_t = jnp.transpose(weight)                              # (E, V)
    bias = bias.astype(jnp.float32)
    if v_pad != V:
        w_t = jnp.pad(w_t, ((0, 0), (0, v_pad - V)))
        bias = jnp.pad(bias, (0, v_pad - V))
    w_t_bf16 = w_t.astype(jnp.bfloat16)
    bias2d = bias.reshape(1, v_pad)
    return w_t_bf16, bias2d, tile_v


def word2vec_forward(indices, emb_table, w_t_bf16, bias2d, tile_v):
    """Forward pass. w_t_bf16 / bias2d / tile_v come from prepare_linear_params."""
    B, C = indices.shape
    V, E = emb_table.shape
    E_w, v_pad = w_t_bf16.shape
    assert E_w == E and v_pad % tile_v == 0
    n_tiles = v_pad // tile_v

    # ---- kernel 1: embedding gather + context mean ------------------------
    mean = embedding_context_mean(indices, emb_table)        # (B, E) f32
    mean_bf16 = mean.astype(jnp.bfloat16)                    # MXU-native stream

    # ---- kernel 2: streamed V-tiled linear ---------------------------------
    # VMEM: double-buffered weight/bias/output tiles + resident bf16 mean.
    vmem_bytes = (2 * (E * tile_v * 2 + tile_v * 4 + B * tile_v * 4)
                  + 2 * B * E * 2)
    vmem_limit = min(max(2 * vmem_bytes, 4 << 20), 32 << 20)

    out_padded = pl.pallas_call(
        _linear_kernel,
        out_shape=jax.ShapeDtypeStruct((B, v_pad), jnp.float32),
        grid_spec=pltpu.PrefetchScalarGridSpec(
            num_scalar_prefetch=0,
            grid=(n_tiles,),
            in_specs=[
                pl.BlockSpec((B, E), lambda j: (0, 0)),        # mean (resident)
                pl.BlockSpec((E, tile_v), lambda j: (0, j)),   # W.T tile (bf16)
                pl.BlockSpec((1, tile_v), lambda j: (0, j)),   # bias tile
            ],
            out_specs=pl.BlockSpec((B, tile_v), lambda j: (0, j)),
        ),
        compiler_params=pltpu.CompilerParams(
            # No state persists across vocab tiles -> safe to split the axis
            # across both v7x TensorCores; no-op on single-core v5e/v6e.
            dimension_semantics=("parallel",),
            vmem_limit_bytes=vmem_limit,
        ),
        cost_estimate=pl.CostEstimate(
            flops=2 * B * E * v_pad,
            transcendentals=0,
            bytes_accessed=(E * v_pad * 2       # bf16 weight stream
                            + v_pad * 4         # bias
                            + B * v_pad * 4     # output
                            + B * E * 2),       # mean
        ),
    )(mean_bf16, w_t_bf16, bias2d)

    return out_padded[:, :V]


def word2vec_reference(indices, emb_table, weight, bias):
    embeds = emb_table[indices]                  # (B, C, E)
    mean = jnp.mean(embeds, axis=1)              # (B, E)
    return mean @ weight.T + bias                # (B, V)


if __name__ == "__main__":
    # Small synthetic shapes consistent with the module's forward.
    # VOCAB deliberately not a multiple of 128 to exercise the padding path;
    # the tile chooser picks tile_v=1024 -> 2 streamed weight tiles.
    VOCAB = 2000
    EMB = 128
    BATCH = 4
    CONTEXT = 8

    key = jax.random.PRNGKey(0)
    k_emb, k_w, k_b, k_idx = jax.random.split(key, 4)

    # Deterministic init mimicking torch defaults:
    #   nn.Embedding ~ N(0, 1); nn.Linear ~ U(-1/sqrt(E), 1/sqrt(E)).
    emb_table = jax.random.normal(k_emb, (VOCAB, EMB), dtype=jnp.float32)
    bound = 1.0 / float(EMB) ** 0.5
    weight = jax.random.uniform(k_w, (VOCAB, EMB), minval=-bound, maxval=bound,
                                dtype=jnp.float32)
    bias = jax.random.uniform(k_b, (VOCAB,), minval=-bound, maxval=bound,
                              dtype=jnp.float32)
    indices = jax.random.randint(k_idx, (BATCH, CONTEXT), 0, VOCAB,
                                 dtype=jnp.int32)

    # One-time parameter prep (transpose / pad / bf16 cast) outside the
    # per-call forward path.
    w_t_bf16, bias2d, tile_v = prepare_linear_params(weight, bias)
    w_t_bf16 = jax.block_until_ready(w_t_bf16)

    out = word2vec_forward(indices, emb_table, w_t_bf16, bias2d, tile_v)
    out = jax.block_until_ready(out)

    ref = word2vec_reference(indices, emb_table, weight, bias)
    assert out.shape == (BATCH, VOCAB)
    # bf16 weight stream with f32 MXU accumulation: compare against the f32
    # reference with a bf16-appropriate tolerance.
    assert jnp.allclose(out, ref, atol=2e-2, rtol=2e-2)

    print("KERNEL_OK")
</pallas_src>

<mosaic_0001>
module attributes {stable_mosaic.version = 11 : i64} {
  func.func @_mean_kernel(%arg0: i32, %arg1: memref<4x8xi32, #tpu.memory_space<smem>>, %arg2: memref<2000x128xf32, #tpu.memory_space<any>>, %arg3: memref<4x128xf32, #tpu.memory_space<vmem>>, %arg4: memref<8x4x128xf32, #tpu.memory_space<vmem>>, %arg5: memref<!tpu.dma_semaphore, #tpu.memory_space<semaphore_mem>>) attributes {dimension_semantics = [#tpu.dimension_semantics<arbitrary>], iteration_bounds = array<i64: 1>, scalar_prefetch = 1 : i64, scratch_operands = 2 : i64, tpu.core_type = #tpu.core_type<tc>, window_params = [{}, {pipeline_mode = #tpu.pipeline_mode<synchronous>, transform_indices = @transform_1, window_bounds = array<i64: 4, 128>}]} {
    %c0 = arith.constant 0 : index
    %c0_0 = arith.constant 0 : index
    %0 = memref.load %arg1[%c0, %c0_0] : memref<4x8xi32, #tpu.memory_space<smem>>
    %c0_i32 = arith.constant 0 : i32
    %1 = arith.maxsi %0, %c0_i32 : i32
    %c1999_i32 = arith.constant 1999 : i32
    %2 = arith.minsi %1, %c1999_i32 : i32
    %c0_i32_1 = arith.constant 0 : i32
    %c0_i32_2 = arith.constant 0 : i32
    %3 = tpu.memref_slice %arg2[%2, %c0_i32_2] : memref<2000x128xf32, #tpu.memory_space<any>> -> memref<1x128xf32, #tpu.memory_space<any>>
    %c0_i32_3 = arith.constant 0 : i32
    %c0_i32_4 = arith.constant 0 : i32
    %4 = tpu.memref_slice %arg4[%c0_i32_1, %c0_i32_3, %c0_i32_4] : memref<8x4x128xf32, #tpu.memory_space<vmem>> -> memref<1x1x128xf32, #tpu.memory_space<vmem>>
    %5 = tpu.memref_squeeze %4 : memref<1x1x128xf32, #tpu.memory_space<vmem>> -> memref<1x128xf32, #tpu.memory_space<vmem>>
    tpu.enqueue_dma source(%3 : memref<1x128xf32, #tpu.memory_space<any>>) target(%5 : memref<1x128xf32, #tpu.memory_space<vmem>>) target_semaphore(%arg5 : memref<!tpu.dma_semaphore, #tpu.memory_space<semaphore_mem>>)
    %c1 = arith.constant 1 : index
    %c0_5 = arith.constant 0 : index
    %6 = memref.load %arg1[%c1, %c0_5] : memref<4x8xi32, #tpu.memory_space<smem>>
    %c0_i32_6 = arith.constant 0 : i32
    %7 = arith.maxsi %6, %c0_i32_6 : i32
    %c1999_i32_7 = arith.constant 1999 : i32
    %8 = arith.minsi %7, %c1999_i32_7 : i32
    %c0_i32_8 = arith.constant 0 : i32
    %c0_i32_9 = arith.constant 0 : i32
    %9 = tpu.memref_slice %arg2[%8, %c0_i32_9] : memref<2000x128xf32, #tpu.memory_space<any>> -> memref<1x128xf32, #tpu.memory_space<any>>
    %c1_i32 = arith.constant 1 : i32
    %c0_i32_10 = arith.constant 0 : i32
    %10 = tpu.memref_slice %arg4[%c0_i32_8, %c1_i32, %c0_i32_10] : memref<8x4x128xf32, #tpu.memory_space<vmem>> -> memref<1x1x128xf32, #tpu.memory_space<vmem>>
    %11 = tpu.memref_squeeze %10 : memref<1x1x128xf32, #tpu.memory_space<vmem>> -> memref<1x128xf32, #tpu.memory_space<vmem>>
    tpu.enqueue_dma source(%9 : memref<1x128xf32, #tpu.memory_space<any>>) target(%11 : memref<1x128xf32, #tpu.memory_space<vmem>>) target_semaphore(%arg5 : memref<!tpu.dma_semaphore, #tpu.memory_space<semaphore_mem>>)
    %c2 = arith.constant 2 : index
    %c0_11 = arith.constant 0 : index
    %12 = memref.load %arg1[%c2, %c0_11] : memref<4x8xi32, #tpu.memory_space<smem>>
    %c0_i32_12 = arith.constant 0 : i32
    %13 = arith.maxsi %12, %c0_i32_12 : i32
    %c1999_i32_13 = arith.constant 1999 : i32
    %14 = arith.minsi %13, %c1999_i32_13 : i32
    %c0_i32_14 = arith.constant 0 : i32
    %c0_i32_15 = arith.constant 0 : i32
    %15 = tpu.memref_slice %arg2[%14, %c0_i32_15] : memref<2000x128xf32, #tpu.memory_space<any>> -> memref<1x128xf32, #tpu.memory_space<any>>
    %c2_i32 = arith.constant 2 : i32
    %c0_i32_16 = arith.constant 0 : i32
    %16 = tpu.memref_slice %arg4[%c0_i32_14, %c2_i32, %c0_i32_16] : memref<8x4x128xf32, #tpu.memory_space<vmem>> -> memref<1x1x128xf32, #tpu.memory_space<vmem>>
    %17 = tpu.memref_squeeze %16 : memref<1x1x128xf32, #tpu.memory_space<vmem>> -> memref<1x128xf32, #tpu.memory_space<vmem>>
    tpu.enqueue_dma source(%15 : memref<1x128xf32, #tpu.memory_space<any>>) target(%17 : memref<1x128xf32, #tpu.memory_space<vmem>>) target_semaphore(%arg5 : memref<!tpu.dma_semaphore, #tpu.memory_space<semaphore_mem>>)
    %c3 = arith.constant 3 : index
    %c0_17 = arith.constant 0 : index
    %18 = memref.load %arg1[%c3, %c0_17] : memref<4x8xi32, #tpu.memory_space<smem>>
    %c0_i32_18 = arith.constant 0 : i32
    %19 = arith.maxsi %18, %c0_i32_18 : i32
    %c1999_i32_19 = arith.constant 1999 : i32
    %20 = arith.minsi %19, %c1999_i32_19 : i32
    %c0_i32_20 = arith.constant 0 : i32
    %c0_i32_21 = arith.constant 0 : i32
    %21 = tpu.memref_slice %arg2[%20, %c0_i32_21] : memref<2000x128xf32, #tpu.memory_space<any>> -> memref<1x128xf32, #tpu.memory_space<any>>
    %c3_i32 = arith.constant 3 : i32
    %c0_i32_22 = arith.constant 0 : i32
    %22 = tpu.memref_slice %arg4[%c0_i32_20, %c3_i32, %c0_i32_22] : memref<8x4x128xf32, #tpu.memory_space<vmem>> -> memref<1x1x128xf32, #tpu.memory_space<vmem>>
    %23 = tpu.memref_squeeze %22 : memref<1x1x128xf32, #tpu.memory_space<vmem>> -> memref<1x128xf32, #tpu.memory_space<vmem>>
    tpu.enqueue_dma source(%21 : memref<1x128xf32, #tpu.memory_space<any>>) target(%23 : memref<1x128xf32, #tpu.memory_space<vmem>>) target_semaphore(%arg5 : memref<!tpu.dma_semaphore, #tpu.memory_space<semaphore_mem>>)
    %c0_23 = arith.constant 0 : index
    %c1_24 = arith.constant 1 : index
    %24 = memref.load %arg1[%c0_23, %c1_24] : memref<4x8xi32, #tpu.memory_space<smem>>
    %c0_i32_25 = arith.constant 0 : i32
    %25 = arith.maxsi %24, %c0_i32_25 : i32
    %c1999_i32_26 = arith.constant 1999 : i32
    %26 = arith.minsi %25, %c1999_i32_26 : i32
    %c1_i32_27 = arith.constant 1 : i32
    %c0_i32_28 = arith.constant 0 : i32
    %27 = tpu.memref_slice %arg2[%26, %c0_i32_28] : memref<2000x128xf32, #tpu.memory_space<any>> -> memref<1x128xf32, #tpu.memory_space<any>>
    %c0_i32_29 = arith.constant 0 : i32
    %c0_i32_30 = arith.constant 0 : i32
    %28 = tpu.memref_slice %arg4[%c1_i32_27, %c0_i32_29, %c0_i32_30] : memref<8x4x128xf32, #tpu.memory_space<vmem>> -> memref<1x1x128xf32, #tpu.memory_space<vmem>>
    %29 = tpu.memref_squeeze %28 : memref<1x1x128xf32, #tpu.memory_space<vmem>> -> memref<1x128xf32, #tpu.memory_space<vmem>>
    tpu.enqueue_dma source(%27 : memref<1x128xf32, #tpu.memory_space<any>>) target(%29 : memref<1x128xf32, #tpu.memory_space<vmem>>) target_semaphore(%arg5 : memref<!tpu.dma_semaphore, #tpu.memory_space<semaphore_mem>>)
    %c1_31 = arith.constant 1 : index
    %c1_32 = arith.constant 1 : index
    %30 = memref.load %arg1[%c1_31, %c1_32] : memref<4x8xi32, #tpu.memory_space<smem>>
    %c0_i32_33 = arith.constant 0 : i32
    %31 = arith.maxsi %30, %c0_i32_33 : i32
    %c1999_i32_34 = arith.constant 1999 : i32
    %32 = arith.minsi %31, %c1999_i32_34 : i32
    %c1_i32_35 = arith.constant 1 : i32
    %c0_i32_36 = arith.constant 0 : i32
    %33 = tpu.memref_slice %arg2[%32, %c0_i32_36] : memref<2000x128xf32, #tpu.memory_space<any>> -> memref<1x128xf32, #tpu.memory_space<any>>
    %c1_i32_37 = arith.constant 1 : i32
    %c0_i32_38 = arith.constant 0 : i32
    %34 = tpu.memref_slice %arg4[%c1_i32_35, %c1_i32_37, %c0_i32_38] : memref<8x4x128xf32, #tpu.memory_space<vmem>> -> memref<1x1x128xf32, #tpu.memory_space<vmem>>
    %35 = tpu.memref_squeeze %34 : memref<1x1x128xf32, #tpu.memory_space<vmem>> -> memref<1x128xf32, #tpu.memory_space<vmem>>
    tpu.enqueue_dma source(%33 : memref<1x128xf32, #tpu.memory_space<any>>) target(%35 : memref<1x128xf32, #tpu.memory_space<vmem>>) target_semaphore(%arg5 : memref<!tpu.dma_semaphore, #tpu.memory_space<semaphore_mem>>)
    %c2_39 = arith.constant 2 : index
    %c1_40 = arith.constant 1 : index
    %36 = memref.load %arg1[%c2_39, %c1_40] : memref<4x8xi32, #tpu.memory_space<smem>>
    %c0_i32_41 = arith.constant 0 : i32
    %37 = arith.maxsi %36, %c0_i32_41 : i32
    %c1999_i32_42 = arith.constant 1999 : i32
    %38 = arith.minsi %37, %c1999_i32_42 : i32
    %c1_i32_43 = arith.constant 1 : i32
    %c0_i32_44 = arith.constant 0 : i32
    %39 = tpu.memref_slice %arg2[%38, %c0_i32_44] : memref<2000x128xf32, #tpu.memory_space<any>> -> memref<1x128xf32, #tpu.memory_space<any>>
    %c2_i32_45 = arith.constant 2 : i32
    %c0_i32_46 = arith.constant 0 : i32
    %40 = tpu.memref_slice %arg4[%c1_i32_43, %c2_i32_45, %c0_i32_46] : memref<8x4x128xf32, #tpu.memory_space<vmem>> -> memref<1x1x128xf32, #tpu.memory_space<vmem>>
    %41 = tpu.memref_squeeze %40 : memref<1x1x128xf32, #tpu.memory_space<vmem>> -> memref<1x128xf32, #tpu.memory_space<vmem>>
    tpu.enqueue_dma source(%39 : memref<1x128xf32, #tpu.memory_space<any>>) target(%41 : memref<1x128xf32, #tpu.memory_space<vmem>>) target_semaphore(%arg5 : memref<!tpu.dma_semaphore, #tpu.memory_space<semaphore_mem>>)
    %c3_47 = arith.constant 3 : index
    %c1_48 = arith.constant 1 : index
    %42 = memref.load %arg1[%c3_47, %c1_48] : memref<4x8xi32, #tpu.memory_space<smem>>
    %c0_i32_49 = arith.constant 0 : i32
    %43 = arith.maxsi %42, %c0_i32_49 : i32
    %c1999_i32_50 = arith.constant 1999 : i32
    %44 = arith.minsi %43, %c1999_i32_50 : i32
    %c1_i32_51 = arith.constant 1 : i32
    %c0_i32_52 = arith.constant 0 : i32
    %45 = tpu.memref_slice %arg2[%44, %c0_i32_52] : memref<2000x128xf32, #tpu.memory_space<any>> -> memref<1x128xf32, #tpu.memory_space<any>>
    %c3_i32_53 = arith.constant 3 : i32
    %c0_i32_54 = arith.constant 0 : i32
    %46 = tpu.memref_slice %arg4[%c1_i32_51, %c3_i32_53, %c0_i32_54] : memref<8x4x128xf32, #tpu.memory_space<vmem>> -> memref<1x1x128xf32, #tpu.memory_space<vmem>>
    %47 = tpu.memref_squeeze %46 : memref<1x1x128xf32, #tpu.memory_space<vmem>> -> memref<1x128xf32, #tpu.memory_space<vmem>>
    tpu.enqueue_dma source(%45 : memref<1x128xf32, #tpu.memory_space<any>>) target(%47 : memref<1x128xf32, #tpu.memory_space<vmem>>) target_semaphore(%arg5 : memref<!tpu.dma_semaphore, #tpu.memory_space<semaphore_mem>>)
    %c0_55 = arith.constant 0 : index
    %c2_56 = arith.constant 2 : index
    %48 = memref.load %arg1[%c0_55, %c2_56] : memref<4x8xi32, #tpu.memory_space<smem>>
    %c0_i32_57 = arith.constant 0 : i32
    %49 = arith.maxsi %48, %c0_i32_57 : i32
    %c1999_i32_58 = arith.constant 1999 : i32
    %50 = arith.minsi %49, %c1999_i32_58 : i32
    %c2_i32_59 = arith.constant 2 : i32
    %c0_i32_60 = arith.constant 0 : i32
    %51 = tpu.memref_slice %arg2[%50, %c0_i32_60] : memref<2000x128xf32, #tpu.memory_space<any>> -> memref<1x128xf32, #tpu.memory_space<any>>
    %c0_i32_61 = arith.constant 0 : i32
    %c0_i32_62 = arith.constant 0 : i32
    %52 = tpu.memref_slice %arg4[%c2_i32_59, %c0_i32_61, %c0_i32_62] : memref<8x4x128xf32, #tpu.memory_space<vmem>> -> memref<1x1x128xf32, #tpu.memory_space<vmem>>
    %53 = tpu.memref_squeeze %52 : memref<1x1x128xf32, #tpu.memory_space<vmem>> -> memref<1x128xf32, #tpu.memory_space<vmem>>
    tpu.enqueue_dma source(%51 : memref<1x128xf32, #tpu.memory_space<any>>) target(%53 : memref<1x128xf32, #tpu.memory_space<vmem>>) target_semaphore(%arg5 : memref<!tpu.dma_semaphore, #tpu.memory_space<semaphore_mem>>)
    %c1_63 = arith.constant 1 : index
    %c2_64 = arith.constant 2 : index
    %54 = memref.load %arg1[%c1_63, %c2_64] : memref<4x8xi32, #tpu.memory_space<smem>>
    %c0_i32_65 = arith.constant 0 : i32
    %55 = arith.maxsi %54, %c0_i32_65 : i32
    %c1999_i32_66 = arith.constant 1999 : i32
    %56 = arith.minsi %55, %c1999_i32_66 : i32
    %c2_i32_67 = arith.constant 2 : i32
    %c0_i32_68 = arith.constant 0 : i32
    %57 = tpu.memref_slice %arg2[%56, %c0_i32_68] : memref<2000x128xf32, #tpu.memory_space<any>> -> memref<1x128xf32, #tpu.memory_space<any>>
    %c1_i32_69 = arith.constant 1 : i32
    %c0_i32_70 = arith.constant 0 : i32
    %58 = tpu.memref_slice %arg4[%c2_i32_67, %c1_i32_69, %c0_i32_70] : memref<8x4x128xf32, #tpu.memory_space<vmem>> -> memref<1x1x128xf32, #tpu.memory_space<vmem>>
    %59 = tpu.memref_squeeze %58 : memref<1x1x128xf32, #tpu.memory_space<vmem>> -> memref<1x128xf32, #tpu.memory_space<vmem>>
    tpu.enqueue_dma source(%57 : memref<1x128xf32, #tpu.memory_space<any>>) target(%59 : memref<1x128xf32, #tpu.memory_space<vmem>>) target_semaphore(%arg5 : memref<!tpu.dma_semaphore, #tpu.memory_space<semaphore_mem>>)
    %c2_71 = arith.constant 2 : index
    %c2_72 = arith.constant 2 : index
    %60 = memref.load %arg1[%c2_71, %c2_72] : memref<4x8xi32, #tpu.memory_space<smem>>
    %c0_i32_73 = arith.constant 0 : i32
    %61 = arith.maxsi %60, %c0_i32_73 : i32
    %c1999_i32_74 = arith.constant 1999 : i32
    %62 = arith.minsi %61, %c1999_i32_74 : i32
    %c2_i32_75 = arith.constant 2 : i32
    %c0_i32_76 = arith.constant 0 : i32
    %63 = tpu.memref_slice %arg2[%62, %c0_i32_76] : memref<2000x128xf32, #tpu.memory_space<any>> -> memref<1x128xf32, #tpu.memory_space<any>>
    %c2_i32_77 = arith.constant 2 : i32
    %c0_i32_78 = arith.constant 0 : i32
    %64 = tpu.memref_slice %arg4[%c2_i32_75, %c2_i32_77, %c0_i32_78] : memref<8x4x128xf32, #tpu.memory_space<vmem>> -> memref<1x1x128xf32, #tpu.memory_space<vmem>>
    %65 = tpu.memref_squeeze %64 : memref<1x1x128xf32, #tpu.memory_space<vmem>> -> memref<1x128xf32, #tpu.memory_space<vmem>>
    tpu.enqueue_dma source(%63 : memref<1x128xf32, #tpu.memory_space<any>>) target(%65 : memref<1x128xf32, #tpu.memory_space<vmem>>) target_semaphore(%arg5 : memref<!tpu.dma_semaphore, #tpu.memory_space<semaphore_mem>>)
    %c3_79 = arith.constant 3 : index
    %c2_80 = arith.constant 2 : index
    %66 = memref.load %arg1[%c3_79, %c2_80] : memref<4x8xi32, #tpu.memory_space<smem>>
    %c0_i32_81 = arith.constant 0 : i32
    %67 = arith.maxsi %66, %c0_i32_81 : i32
    %c1999_i32_82 = arith.constant 1999 : i32
    %68 = arith.minsi %67, %c1999_i32_82 : i32
    %c2_i32_83 = arith.constant 2 : i32
    %c0_i32_84 = arith.constant 0 : i32
    %69 = tpu.memref_slice %arg2[%68, %c0_i32_84] : memref<2000x128xf32, #tpu.memory_space<any>> -> memref<1x128xf32, #tpu.memory_space<any>>
    %c3_i32_85 = arith.constant 3 : i32
    %c0_i32_86 = arith.constant 0 : i32
    %70 = tpu.memref_slice %arg4[%c2_i32_83, %c3_i32_85, %c0_i32_86] : memref<8x4x128xf32, #tpu.memory_space<vmem>> -> memref<1x1x128xf32, #tpu.memory_space<vmem>>
    %71 = tpu.memref_squeeze %70 : memref<1x1x128xf32, #tpu.memory_space<vmem>> -> memref<1x128xf32, #tpu.memory_space<vmem>>
    tpu.enqueue_dma source(%69 : memref<1x128xf32, #tpu.memory_space<any>>) target(%71 : memref<1x128xf32, #tpu.memory_space<vmem>>) target_semaphore(%arg5 : memref<!tpu.dma_semaphore, #tpu.memory_space<semaphore_mem>>)
    %c0_87 = arith.constant 0 : index
    %c3_88 = arith.constant 3 : index
    %72 = memref.load %arg1[%c0_87, %c3_88] : memref<4x8xi32, #tpu.memory_space<smem>>
    %c0_i32_89 = arith.constant 0 : i32
    %73 = arith.maxsi %72, %c0_i32_89 : i32
    %c1999_i32_90 = arith.constant 1999 : i32
    %74 = arith.minsi %73, %c1999_i32_90 : i32
    %c3_i32_91 = arith.constant 3 : i32
    %c0_i32_92 = arith.constant 0 : i32
    %75 = tpu.memref_slice %arg2[%74, %c0_i32_92] : memref<2000x128xf32, #tpu.memory_space<any>> -> memref<1x128xf32, #tpu.memory_space<any>>
    %c0_i32_93 = arith.constant 0 : i32
    %c0_i32_94 = arith.constant 0 : i32
    %76 = tpu.memref_slice %arg4[%c3_i32_91, %c0_i32_93, %c0_i32_94] : memref<8x4x128xf32, #tpu.memory_space<vmem>> -> memref<1x1x128xf32, #tpu.memory_space<vmem>>
    %77 = tpu.memref_squeeze %76 : memref<1x1x128xf32, #tpu.memory_space<vmem>> -> memref<1x128xf32, #tpu.memory_space<vmem>>
    tpu.enqueue_dma source(%75 : memref<1x128xf32, #tpu.memory_space<any>>) target(%77 : memref<1x128xf32, #tpu.memory_space<vmem>>) target_semaphore(%arg5 : memref<!tpu.dma_semaphore, #tpu.memory_space<semaphore_mem>>)
    %c1_95 = arith.constant 1 : index
    %c3_96 = arith.constant 3 : index
    %78 = memref.load %arg1[%c1_95, %c3_96] : memref<4x8xi32, #tpu.memory_space<smem>>
    %c0_i32_97 = arith.constant 0 : i32
    %79 = arith.maxsi %78, %c0_i32_97 : i32
    %c1999_i32_98 = arith.constant 1999 : i32
    %80 = arith.minsi %79, %c1999_i32_98 : i32
    %c3_i32_99 = arith.constant 3 : i32
    %c0_i32_100 = arith.constant 0 : i32
    %81 = tpu.memref_slice %arg2[%80, %c0_i32_100] : memref<2000x128xf32, #tpu.memory_space<any>> -> memref<1x128xf32, #tpu.memory_space<any>>
    %c1_i32_101 = arith.constant 1 : i32
    %c0_i32_102 = arith.constant 0 : i32
    %82 = tpu.memref_slice %arg4[%c3_i32_99, %c1_i32_101, %c0_i32_102] : memref<8x4x128xf32, #tpu.memory_space<vmem>> -> memref<1x1x128xf32, #tpu.memory_space<vmem>>
    %83 = tpu.memref_squeeze %82 : memref<1x1x128xf32, #tpu.memory_space<vmem>> -> memref<1x128xf32, #tpu.memory_space<vmem>>
    tpu.enqueue_dma source(%81 : memref<1x128xf32, #tpu.memory_space<any>>) target(%83 : memref<1x128xf32, #tpu.memory_space<vmem>>) target_semaphore(%arg5 : memref<!tpu.dma_semaphore, #tpu.memory_space<semaphore_mem>>)
    %c2_103 = arith.constant 2 : index
    %c3_104 = arith.constant 3 : index
    %84 = memref.load %arg1[%c2_103, %c3_104] : memref<4x8xi32, #tpu.memory_space<smem>>
    %c0_i32_105 = arith.constant 0 : i32
    %85 = arith.maxsi %84, %c0_i32_105 : i32
    %c1999_i32_106 = arith.constant 1999 : i32
    %86 = arith.minsi %85, %c1999_i32_106 : i32
    %c3_i32_107 = arith.constant 3 : i32
    %c0_i32_108 = arith.constant 0 : i32
    %87 = tpu.memref_slice %arg2[%86, %c0_i32_108] : memref<2000x128xf32, #tpu.memory_space<any>> -> memref<1x128xf32, #tpu.memory_space<any>>
    %c2_i32_109 = arith.constant 2 : i32
    %c0_i32_110 = arith.constant 0 : i32
    %88 = tpu.memref_slice %arg4[%c3_i32_107, %c2_i32_109, %c0_i32_110] : memref<8x4x128xf32, #tpu.memory_space<vmem>> -> memref<1x1x128xf32, #tpu.memory_space<vmem>>
    %89 = tpu.memref_squeeze %88 : memref<1x1x128xf32, #tpu.memory_space<vmem>> -> memref<1x128xf32, #tpu.memory_space<vmem>>
    tpu.enqueue_dma source(%87 : memref<1x128xf32, #tpu.memory_space<any>>) target(%89 : memref<1x128xf32, #tpu.memory_space<vmem>>) target_semaphore(%arg5 : memref<!tpu.dma_semaphore, #tpu.memory_space<semaphore_mem>>)
    %c3_111 = arith.constant 3 : index
    %c3_112 = arith.constant 3 : index
    %90 = memref.load %arg1[%c3_111, %c3_112] : memref<4x8xi32, #tpu.memory_space<smem>>
    %c0_i32_113 = arith.constant 0 : i32
    %91 = arith.maxsi %90, %c0_i32_113 : i32
    %c1999_i32_114 = arith.constant 1999 : i32
    %92 = arith.minsi %91, %c1999_i32_114 : i32
    %c3_i32_115 = arith.constant 3 : i32
    %c0_i32_116 = arith.constant 0 : i32
    %93 = tpu.memref_slice %arg2[%92, %c0_i32_116] : memref<2000x128xf32, #tpu.memory_space<any>> -> memref<1x128xf32, #tpu.memory_space<any>>
    %c3_i32_117 = arith.constant 3 : i32
    %c0_i32_118 = arith.constant 0 : i32
    %94 = tpu.memref_slice %arg4[%c3_i32_115, %c3_i32_117, %c0_i32_118] : memref<8x4x128xf32, #tpu.memory_space<vmem>> -> memref<1x1x128xf32, #tpu.memory_space<vmem>>
    %95 = tpu.memref_squeeze %94 : memref<1x1x128xf32, #tpu.memory_space<vmem>> -> memref<1x128xf32, #tpu.memory_space<vmem>>
    tpu.enqueue_dma source(%93 : memref<1x128xf32, #tpu.memory_space<any>>) target(%95 : memref<1x128xf32, #tpu.memory_space<vmem>>) target_semaphore(%arg5 : memref<!tpu.dma_semaphore, #tpu.memory_space<semaphore_mem>>)
    %c0_119 = arith.constant 0 : index
    %c4 = arith.constant 4 : index
    %96 = memref.load %arg1[%c0_119, %c4] : memref<4x8xi32, #tpu.memory_space<smem>>
    %c0_i32_120 = arith.constant 0 : i32
    %97 = arith.maxsi %96, %c0_i32_120 : i32
    %c1999_i32_121 = arith.constant 1999 : i32
    %98 = arith.minsi %97, %c1999_i32_121 : i32
    %c4_i32 = arith.constant 4 : i32
    %c0_i32_122 = arith.constant 0 : i32
    %99 = tpu.memref_slice %arg2[%98, %c0_i32_122] : memref<2000x128xf32, #tpu.memory_space<any>> -> memref<1x128xf32, #tpu.memory_space<any>>
    %c0_i32_123 = arith.constant 0 : i32
    %c0_i32_124 = arith.constant 0 : i32
    %100 = tpu.memref_slice %arg4[%c4_i32, %c0_i32_123, %c0_i32_124] : memref<8x4x128xf32, #tpu.memory_space<vmem>> -> memref<1x1x128xf32, #tpu.memory_space<vmem>>
    %101 = tpu.memref_squeeze %100 : memref<1x1x128xf32, #tpu.memory_space<vmem>> -> memref<1x128xf32, #tpu.memory_space<vmem>>
    tpu.enqueue_dma source(%99 : memref<1x128xf32, #tpu.memory_space<any>>) target(%101 : memref<1x128xf32, #tpu.memory_space<vmem>>) target_semaphore(%arg5 : memref<!tpu.dma_semaphore, #tpu.memory_space<semaphore_mem>>)
    %c1_125 = arith.constant 1 : index
    %c4_126 = arith.constant 4 : index
    %102 = memref.load %arg1[%c1_125, %c4_126] : memref<4x8xi32, #tpu.memory_space<smem>>
    %c0_i32_127 = arith.constant 0 : i32
    %103 = arith.maxsi %102, %c0_i32_127 : i32
    %c1999_i32_128 = arith.constant 1999 : i32
    %104 = arith.minsi %103, %c1999_i32_128 : i32
    %c4_i32_129 = arith.constant 4 : i32
    %c0_i32_130 = arith.constant 0 : i32
    %105 = tpu.memref_slice %arg2[%104, %c0_i32_130] : memref<2000x128xf32, #tpu.memory_space<any>> -> memref<1x128xf32, #tpu.memory_space<any>>
    %c1_i32_131 = arith.constant 1 : i32
    %c0_i32_132 = arith.constant 0 : i32
    %106 = tpu.memref_slice %arg4[%c4_i32_129, %c1_i32_131, %c0_i32_132] : memref<8x4x128xf32, #tpu.memory_space<vmem>> -> memref<1x1x128xf32, #tpu.memory_space<vmem>>
    %107 = tpu.memref_squeeze %106 : memref<1x1x128xf32, #tpu.memory_space<vmem>> -> memref<1x128xf32, #tpu.memory_space<vmem>>
    tpu.enqueue_dma source(%105 : memref<1x128xf32, #tpu.memory_space<any>>) target(%107 : memref<1x128xf32, #tpu.memory_space<vmem>>) target_semaphore(%arg5 : memref<!tpu.dma_semaphore, #tpu.memory_space<semaphore_mem>>)
    %c2_133 = arith.constant 2 : index
    %c4_134 = arith.constant 4 : index
    %108 = memref.load %arg1[%c2_133, %c4_134] : memref<4x8xi32, #tpu.memory_space<smem>>
    %c0_i32_135 = arith.constant 0 : i32
    %109 = arith.maxsi %108, %c0_i32_135 : i32
    %c1999_i32_136 = arith.constant 1999 : i32
    %110 = arith.minsi %109, %c1999_i32_136 : i32
    %c4_i32_137 = arith.constant 4 : i32
    %c0_i32_138 = arith.constant 0 : i32
    %111 = tpu.memref_slice %arg2[%110, %c0_i32_138] : memref<2000x128xf32, #tpu.memory_space<any>> -> memref<1x128xf32, #tpu.memory_space<any>>
    %c2_i32_139 = arith.constant 2 : i32
    %c0_i32_140 = arith.constant 0 : i32
    %112 = tpu.memref_slice %arg4[%c4_i32_137, %c2_i32_139, %c0_i32_140] : memref<8x4x128xf32, #tpu.memory_space<vmem>> -> memref<1x1x128xf32, #tpu.memory_space<vmem>>
    %113 = tpu.memref_squeeze %112 : memref<1x1x128xf32, #tpu.memory_space<vmem>> -> memref<1x128xf32, #tpu.memory_space<vmem>>
    tpu.enqueue_dma source(%111 : memref<1x128xf32, #tpu.memory_space<any>>) target(%113 : memref<1x128xf32, #tpu.memory_space<vmem>>) target_semaphore(%arg5 : memref<!tpu.dma_semaphore, #tpu.memory_space<semaphore_mem>>)
    %c3_141 = arith.constant 3 : index
    %c4_142 = arith.constant 4 : index
    %114 = memref.load %arg1[%c3_141, %c4_142] : memref<4x8xi32, #tpu.memory_space<smem>>
    %c0_i32_143 = arith.constant 0 : i32
    %115 = arith.maxsi %114, %c0_i32_143 : i32
    %c1999_i32_144 = arith.constant 1999 : i32
    %116 = arith.minsi %115, %c1999_i32_144 : i32
    %c4_i32_145 = arith.constant 4 : i32
    %c0_i32_146 = arith.constant 0 : i32
    %117 = tpu.memref_slice %arg2[%116, %c0_i32_146] : memref<2000x128xf32, #tpu.memory_space<any>> -> memref<1x128xf32, #tpu.memory_space<any>>
    %c3_i32_147 = arith.constant 3 : i32
    %c0_i32_148 = arith.constant 0 : i32
    %118 = tpu.memref_slice %arg4[%c4_i32_145, %c3_i32_147, %c0_i32_148] : memref<8x4x128xf32, #tpu.memory_space<vmem>> -> memref<1x1x128xf32, #tpu.memory_space<vmem>>
    %119 = tpu.memref_squeeze %118 : memref<1x1x128xf32, #tpu.memory_space<vmem>> -> memref<1x128xf32, #tpu.memory_space<vmem>>
    tpu.enqueue_dma source(%117 : memref<1x128xf32, #tpu.memory_space<any>>) target(%119 : memref<1x128xf32, #tpu.memory_space<vmem>>) target_semaphore(%arg5 : memref<!tpu.dma_semaphore, #tpu.memory_space<semaphore_mem>>)
    %c0_149 = arith.constant 0 : index
    %c5 = arith.constant 5 : index
    %120 = memref.load %arg1[%c0_149, %c5] : memref<4x8xi32, #tpu.memory_space<smem>>
    %c0_i32_150 = arith.constant 0 : i32
    %121 = arith.maxsi %120, %c0_i32_150 : i32
    %c1999_i32_151 = arith.constant 1999 : i32
    %122 = arith.minsi %121, %c1999_i32_151 : i32
    %c5_i32 = arith.constant 5 : i32
    %c0_i32_152 = arith.constant 0 : i32
    %123 = tpu.memref_slice %arg2[%122, %c0_i32_152] : memref<2000x128xf32, #tpu.memory_space<any>> -> memref<1x128xf32, #tpu.memory_space<any>>
    %c0_i32_153 = arith.constant 0 : i32
    %c0_i32_154 = arith.constant 0 : i32
    %124 = tpu.memref_slice %arg4[%c5_i32, %c0_i32_153, %c0_i32_154] : memref<8x4x128xf32, #tpu.memory_space<vmem>> -> memref<1x1x128xf32, #tpu.memory_space<vmem>>
    %125 = tpu.memref_squeeze %124 : memref<1x1x128xf32, #tpu.memory_space<vmem>> -> memref<1x128xf32, #tpu.memory_space<vmem>>
    tpu.enqueue_dma source(%123 : memref<1x128xf32, #tpu.memory_space<any>>) target(%125 : memref<1x128xf32, #tpu.memory_space<vmem>>) target_semaphore(%arg5 : memref<!tpu.dma_semaphore, #tpu.memory_space<semaphore_mem>>)
    %c1_155 = arith.constant 1 : index
    %c5_156 = arith.constant 5 : index
    %126 = memref.load %arg1[%c1_155, %c5_156] : memref<4x8xi32, #tpu.memory_space<smem>>
    %c0_i32_157 = arith.constant 0 : i32
    %127 = arith.maxsi %126, %c0_i32_157 : i32
    %c1999_i32_158 = arith.constant 1999 : i32
    %128 = arith.minsi %127, %c1999_i32_158 : i32
    %c5_i32_159 = arith.constant 5 : i32
    %c0_i32_160 = arith.constant 0 : i32
    %129 = tpu.memref_slice %arg2[%128, %c0_i32_160] : memref<2000x128xf32, #tpu.memory_space<any>> -> memref<1x128xf32, #tpu.memory_space<any>>
    %c1_i32_161 = arith.constant 1 : i32
    %c0_i32_162 = arith.constant 0 : i32
    %130 = tpu.memref_slice %arg4[%c5_i32_159, %c1_i32_161, %c0_i32_162] : memref<8x4x128xf32, #tpu.memory_space<vmem>> -> memref<1x1x128xf32, #tpu.memory_space<vmem>>
    %131 = tpu.memref_squeeze %130 : memref<1x1x128xf32, #tpu.memory_space<vmem>> -> memref<1x128xf32, #tpu.memory_space<vmem>>
    tpu.enqueue_dma source(%129 : memref<1x128xf32, #tpu.memory_space<any>>) target(%131 : memref<1x128xf32, #tpu.memory_space<vmem>>) target_semaphore(%arg5 : memref<!tpu.dma_semaphore, #tpu.memory_space<semaphore_mem>>)
    %c2_163 = arith.constant 2 : index
    %c5_164 = arith.constant 5 : index
    %132 = memref.load %arg1[%c2_163, %c5_164] : memref<4x8xi32, #tpu.memory_space<smem>>
    %c0_i32_165 = arith.constant 0 : i32
    %133 = arith.maxsi %132, %c0_i32_165 : i32
    %c1999_i32_166 = arith.constant 1999 : i32
    %134 = arith.minsi %133, %c1999_i32_166 : i32
    %c5_i32_167 = arith.constant 5 : i32
    %c0_i32_168 = arith.constant 0 : i32
    %135 = tpu.memref_slice %arg2[%134, %c0_i32_168] : memref<2000x128xf32, #tpu.memory_space<any>> -> memref<1x128xf32, #tpu.memory_space<any>>
    %c2_i32_169 = arith.constant 2 : i32
    %c0_i32_170 = arith.constant 0 : i32
    %136 = tpu.memref_slice %arg4[%c5_i32_167, %c2_i32_169, %c0_i32_170] : memref<8x4x128xf32, #tpu.memory_space<vmem>> -> memref<1x1x128xf32, #tpu.memory_space<vmem>>
    %137 = tpu.memref_squeeze %136 : memref<1x1x128xf32, #tpu.memory_space<vmem>> -> memref<1x128xf32, #tpu.memory_space<vmem>>
    tpu.enqueue_dma source(%135 : memref<1x128xf32, #tpu.memory_space<any>>) target(%137 : memref<1x128xf32, #tpu.memory_space<vmem>>) target_semaphore(%arg5 : memref<!tpu.dma_semaphore, #tpu.memory_space<semaphore_mem>>)
    %c3_171 = arith.constant 3 : index
    %c5_172 = arith.constant 5 : index
    %138 = memref.load %arg1[%c3_171, %c5_172] : memref<4x8xi32, #tpu.memory_space<smem>>
    %c0_i32_173 = arith.constant 0 : i32
    %139 = arith.maxsi %138, %c0_i32_173 : i32
    %c1999_i32_174 = arith.constant 1999 : i32
    %140 = arith.minsi %139, %c1999_i32_174 : i32
    %c5_i32_175 = arith.constant 5 : i32
    %c0_i32_176 = arith.constant 0 : i32
    %141 = tpu.memref_slice %arg2[%140, %c0_i32_176] : memref<2000x128xf32, #tpu.memory_space<any>> -> memref<1x128xf32, #tpu.memory_space<any>>
    %c3_i32_177 = arith.constant 3 : i32
    %c0_i32_178 = arith.constant 0 : i32
    %142 = tpu.memref_slice %arg4[%c5_i32_175, %c3_i32_177, %c0_i32_178] : memref<8x4x128xf32, #tpu.memory_space<vmem>> -> memref<1x1x128xf32, #tpu.memory_space<vmem>>
    %143 = tpu.memref_squeeze %142 : memref<1x1x128xf32, #tpu.memory_space<vmem>> -> memref<1x128xf32, #tpu.memory_space<vmem>>
    tpu.enqueue_dma source(%141 : memref<1x128xf32, #tpu.memory_space<any>>) target(%143 : memref<1x128xf32, #tpu.memory_space<vmem>>) target_semaphore(%arg5 : memref<!tpu.dma_semaphore, #tpu.memory_space<semaphore_mem>>)
    %c0_179 = arith.constant 0 : index
    %c6 = arith.constant 6 : index
    %144 = memref.load %arg1[%c0_179, %c6] : memref<4x8xi32, #tpu.memory_space<smem>>
    %c0_i32_180 = arith.constant 0 : i32
    %145 = arith.maxsi %144, %c0_i32_180 : i32
    %c1999_i32_181 = arith.constant 1999 : i32
    %146 = arith.minsi %145, %c1999_i32_181 : i32
    %c6_i32 = arith.constant 6 : i32
    %c0_i32_182 = arith.constant 0 : i32
    %147 = tpu.memref_slice %arg2[%146, %c0_i32_182] : memref<2000x128xf32, #tpu.memory_space<any>> -> memref<1x128xf32, #tpu.memory_space<any>>
    %c0_i32_183 = arith.constant 0 : i32
    %c0_i32_184 = arith.constant 0 : i32
    %148 = tpu.memref_slice %arg4[%c6_i32, %c0_i32_183, %c0_i32_184] : memref<8x4x128xf32, #tpu.memory_space<vmem>> -> memref<1x1x128xf32, #tpu.memory_space<vmem>>
    %149 = tpu.memref_squeeze %148 : memref<1x1x128xf32, #tpu.memory_space<vmem>> -> memref<1x128xf32, #tpu.memory_space<vmem>>
    tpu.enqueue_dma source(%147 : memref<1x128xf32, #tpu.memory_space<any>>) target(%149 : memref<1x128xf32, #tpu.memory_space<vmem>>) target_semaphore(%arg5 : memref<!tpu.dma_semaphore, #tpu.memory_space<semaphore_mem>>)
    %c1_185 = arith.constant 1 : index
    %c6_186 = arith.constant 6 : index
    %150 = memref.load %arg1[%c1_185, %c6_186] : memref<4x8xi32, #tpu.memory_space<smem>>
    %c0_i32_187 = arith.constant 0 : i32
    %151 = arith.maxsi %150, %c0_i32_187 : i32
    %c1999_i32_188 = arith.constant 1999 : i32
    %152 = arith.minsi %151, %c1999_i32_188 : i32
    %c6_i32_189 = arith.constant 6 : i32
    %c0_i32_190 = arith.constant 0 : i32
    %153 = tpu.memref_slice %arg2[%152, %c0_i32_190] : memref<2000x128xf32, #tpu.memory_space<any>> -> memref<1x128xf32, #tpu.memory_space<any>>
    %c1_i32_191 = arith.constant 1 : i32
    %c0_i32_192 = arith.constant 0 : i32
    %154 = tpu.memref_slice %arg4[%c6_i32_189, %c1_i32_191, %c0_i32_192] : memref<8x4x128xf32, #tpu.memory_space<vmem>> -> memref<1x1x128xf32, #tpu.memory_space<vmem>>
    %155 = tpu.memref_squeeze %154 : memref<1x1x128xf32, #tpu.memory_space<vmem>> -> memref<1x128xf32, #tpu.memory_space<vmem>>
    tpu.enqueue_dma source(%153 : memref<1x128xf32, #tpu.memory_space<any>>) target(%155 : memref<1x128xf32, #tpu.memory_space<vmem>>) target_semaphore(%arg5 : memref<!tpu.dma_semaphore, #tpu.memory_space<semaphore_mem>>)
    %c2_193 = arith.constant 2 : index
    %c6_194 = arith.constant 6 : index
    %156 = memref.load %arg1[%c2_193, %c6_194] : memref<4x8xi32, #tpu.memory_space<smem>>
    %c0_i32_195 = arith.constant 0 : i32
    %157 = arith.maxsi %156, %c0_i32_195 : i32
    %c1999_i32_196 = arith.constant 1999 : i32
    %158 = arith.minsi %157, %c1999_i32_196 : i32
    %c6_i32_197 = arith.constant 6 : i32
    %c0_i32_198 = arith.constant 0 : i32
    %159 = tpu.memref_slice %arg2[%158, %c0_i32_198] : memref<2000x128xf32, #tpu.memory_space<any>> -> memref<1x128xf32, #tpu.memory_space<any>>
    %c2_i32_199 = arith.constant 2 : i32
    %c0_i32_200 = arith.constant 0 : i32
    %160 = tpu.memref_slice %arg4[%c6_i32_197, %c2_i32_199, %c0_i32_200] : memref<8x4x128xf32, #tpu.memory_space<vmem>> -> memref<1x1x128xf32, #tpu.memory_space<vmem>>
    %161 = tpu.memref_squeeze %160 : memref<1x1x128xf32, #tpu.memory_space<vmem>> -> memref<1x128xf32, #tpu.memory_space<vmem>>
    tpu.enqueue_dma source(%159 : memref<1x128xf32, #tpu.memory_space<any>>) target(%161 : memref<1x128xf32, #tpu.memory_space<vmem>>) target_semaphore(%arg5 : memref<!tpu.dma_semaphore, #tpu.memory_space<semaphore_mem>>)
    %c3_201 = arith.constant 3 : index
    %c6_202 = arith.constant 6 : index
    %162 = memref.load %arg1[%c3_201, %c6_202] : memref<4x8xi32, #tpu.memory_space<smem>>
    %c0_i32_203 = arith.constant 0 : i32
    %163 = arith.maxsi %162, %c0_i32_203 : i32
    %c1999_i32_204 = arith.constant 1999 : i32
    %164 = arith.minsi %163, %c1999_i32_204 : i32
    %c6_i32_205 = arith.constant 6 : i32
    %c0_i32_206 = arith.constant 0 : i32
    %165 = tpu.memref_slice %arg2[%164, %c0_i32_206] : memref<2000x128xf32, #tpu.memory_space<any>> -> memref<1x128xf32, #tpu.memory_space<any>>
    %c3_i32_207 = arith.constant 3 : i32
    %c0_i32_208 = arith.constant 0 : i32
    %166 = tpu.memref_slice %arg4[%c6_i32_205, %c3_i32_207, %c0_i32_208] : memref<8x4x128xf32, #tpu.memory_space<vmem>> -> memref<1x1x128xf32, #tpu.memory_space<vmem>>
    %167 = tpu.memref_squeeze %166 : memref<1x1x128xf32, #tpu.memory_space<vmem>> -> memref<1x128xf32, #tpu.memory_space<vmem>>
    tpu.enqueue_dma source(%165 : memref<1x128xf32, #tpu.memory_space<any>>) target(%167 : memref<1x128xf32, #tpu.memory_space<vmem>>) target_semaphore(%arg5 : memref<!tpu.dma_semaphore, #tpu.memory_space<semaphore_mem>>)
    %c0_209 = arith.constant 0 : index
    %c7 = arith.constant 7 : index
    %168 = memref.load %arg1[%c0_209, %c7] : memref<4x8xi32, #tpu.memory_space<smem>>
    %c0_i32_210 = arith.constant 0 : i32
    %169 = arith.maxsi %168, %c0_i32_210 : i32
    %c1999_i32_211 = arith.constant 1999 : i32
    %170 = arith.minsi %169, %c1999_i32_211 : i32
    %c7_i32 = arith.constant 7 : i32
    %c0_i32_212 = arith.constant 0 : i32
    %171 = tpu.memref_slice %arg2[%170, %c0_i32_212] : memref<2000x128xf32, #tpu.memory_space<any>> -> memref<1x128xf32, #tpu.memory_space<any>>
    %c0_i32_213 = arith.constant 0 : i32
    %c0_i32_214 = arith.constant 0 : i32
    %172 = tpu.memref_slice %arg4[%c7_i32, %c0_i32_213, %c0_i32_214] : memref<8x4x128xf32, #tpu.memory_space<vmem>> -> memref<1x1x128xf32, #tpu.memory_space<vmem>>
    %173 = tpu.memref_squeeze %172 : memref<1x1x128xf32, #tpu.memory_space<vmem>> -> memref<1x128xf32, #tpu.memory_space<vmem>>
    tpu.enqueue_dma source(%171 : memref<1x128xf32, #tpu.memory_space<any>>) target(%173 : memref<1x128xf32, #tpu.memory_space<vmem>>) target_semaphore(%arg5 : memref<!tpu.dma_semaphore, #tpu.memory_space<semaphore_mem>>)
    %c1_215 = arith.constant 1 : index
    %c7_216 = arith.constant 7 : index
    %174 = memref.load %arg1[%c1_215, %c7_216] : memref<4x8xi32, #tpu.memory_space<smem>>
    %c0_i32_217 = arith.constant 0 : i32
    %175 = arith.maxsi %174, %c0_i32_217 : i32
    %c1999_i32_218 = arith.constant 1999 : i32
    %176 = arith.minsi %175, %c1999_i32_218 : i32
    %c7_i32_219 = arith.constant 7 : i32
    %c0_i32_220 = arith.constant 0 : i32
    %177 = tpu.memref_slice %arg2[%176, %c0_i32_220] : memref<2000x128xf32, #tpu.memory_space<any>> -> memref<1x128xf32, #tpu.memory_space<any>>
    %c1_i32_221 = arith.constant 1 : i32
    %c0_i32_222 = arith.constant 0 : i32
    %178 = tpu.memref_slice %arg4[%c7_i32_219, %c1_i32_221, %c0_i32_222] : memref<8x4x128xf32, #tpu.memory_space<vmem>> -> memref<1x1x128xf32, #tpu.memory_space<vmem>>
    %179 = tpu.memref_squeeze %178 : memref<1x1x128xf32, #tpu.memory_space<vmem>> -> memref<1x128xf32, #tpu.memory_space<vmem>>
    tpu.enqueue_dma source(%177 : memref<1x128xf32, #tpu.memory_space<any>>) target(%179 : memref<1x128xf32, #tpu.memory_space<vmem>>) target_semaphore(%arg5 : memref<!tpu.dma_semaphore, #tpu.memory_space<semaphore_mem>>)
    %c2_223 = arith.constant 2 : index
    %c7_224 = arith.constant 7 : index
    %180 = memref.load %arg1[%c2_223, %c7_224] : memref<4x8xi32, #tpu.memory_space<smem>>
    %c0_i32_225 = arith.constant 0 : i32
    %181 = arith.maxsi %180, %c0_i32_225 : i32
    %c1999_i32_226 = arith.constant 1999 : i32
    %182 = arith.minsi %181, %c1999_i32_226 : i32
    %c7_i32_227 = arith.constant 7 : i32
    %c0_i32_228 = arith.constant 0 : i32
    %183 = tpu.memref_slice %arg2[%182, %c0_i32_228] : memref<2000x128xf32, #tpu.memory_space<any>> -> memref<1x128xf32, #tpu.memory_space<any>>
    %c2_i32_229 = arith.constant 2 : i32
    %c0_i32_230 = arith.constant 0 : i32
    %184 = tpu.memref_slice %arg4[%c7_i32_227, %c2_i32_229, %c0_i32_230] : memref<8x4x128xf32, #tpu.memory_space<vmem>> -> memref<1x1x128xf32, #tpu.memory_space<vmem>>
    %185 = tpu.memref_squeeze %184 : memref<1x1x128xf32, #tpu.memory_space<vmem>> -> memref<1x128xf32, #tpu.memory_space<vmem>>
    tpu.enqueue_dma source(%183 : memref<1x128xf32, #tpu.memory_space<any>>) target(%185 : memref<1x128xf32, #tpu.memory_space<vmem>>) target_semaphore(%arg5 : memref<!tpu.dma_semaphore, #tpu.memory_space<semaphore_mem>>)
    %c3_231 = arith.constant 3 : index
    %c7_232 = arith.constant 7 : index
    %186 = memref.load %arg1[%c3_231, %c7_232] : memref<4x8xi32, #tpu.memory_space<smem>>
    %c0_i32_233 = arith.constant 0 : i32
    %187 = arith.maxsi %186, %c0_i32_233 : i32
    %c1999_i32_234 = arith.constant 1999 : i32
    %188 = arith.minsi %187, %c1999_i32_234 : i32
    %c7_i32_235 = arith.constant 7 : i32
    %c0_i32_236 = arith.constant 0 : i32
    %189 = tpu.memref_slice %arg2[%188, %c0_i32_236] : memref<2000x128xf32, #tpu.memory_space<any>> -> memref<1x128xf32, #tpu.memory_space<any>>
    %c3_i32_237 = arith.constant 3 : i32
    %c0_i32_238 = arith.constant 0 : i32
    %190 = tpu.memref_slice %arg4[%c7_i32_235, %c3_i32_237, %c0_i32_238] : memref<8x4x128xf32, #tpu.memory_space<vmem>> -> memref<1x1x128xf32, #tpu.memory_space<vmem>>
    %191 = tpu.memref_squeeze %190 : memref<1x1x128xf32, #tpu.memory_space<vmem>> -> memref<1x128xf32, #tpu.memory_space<vmem>>
    tpu.enqueue_dma source(%189 : memref<1x128xf32, #tpu.memory_space<any>>) target(%191 : memref<1x128xf32, #tpu.memory_space<vmem>>) target_semaphore(%arg5 : memref<!tpu.dma_semaphore, #tpu.memory_space<semaphore_mem>>)
    %c0_i32_239 = arith.constant 0 : i32
    %c0_i32_240 = arith.constant 0 : i32
    %192 = tpu.memref_slice %arg2[%2, %c0_i32_240] : memref<2000x128xf32, #tpu.memory_space<any>> -> memref<1x128xf32, #tpu.memory_space<any>>
    %c0_i32_241 = arith.constant 0 : i32
    %c0_i32_242 = arith.constant 0 : i32
    %193 = tpu.memref_slice %arg4[%c0_i32_239, %c0_i32_241, %c0_i32_242] : memref<8x4x128xf32, #tpu.memory_space<vmem>> -> memref<1x1x128xf32, #tpu.memory_space<vmem>>
    %194 = tpu.memref_squeeze %193 : memref<1x1x128xf32, #tpu.memory_space<vmem>> -> memref<1x128xf32, #tpu.memory_space<vmem>>
    tpu.wait_dma2 semaphore(%arg5 : memref<!tpu.dma_semaphore, #tpu.memory_space<semaphore_mem>>) src(%192 : memref<1x128xf32, #tpu.memory_space<any>>) dst(%194 : memref<1x128xf32, #tpu.memory_space<vmem>>)
    %c0_i32_243 = arith.constant 0 : i32
    %c0_i32_244 = arith.constant 0 : i32
    %195 = tpu.memref_slice %arg2[%8, %c0_i32_244] : memref<2000x128xf32, #tpu.memory_space<any>> -> memref<1x128xf32, #tpu.memory_space<any>>
    %c1_i32_245 = arith.constant 1 : i32
    %c0_i32_246 = arith.constant 0 : i32
    %196 = tpu.memref_slice %arg4[%c0_i32_243, %c1_i32_245, %c0_i32_246] : memref<8x4x128xf32, #tpu.memory_space<vmem>> -> memref<1x1x128xf32, #tpu.memory_space<vmem>>
    %197 = tpu.memref_squeeze %196 : memref<1x1x128xf32, #tpu.memory_space<vmem>> -> memref<1x128xf32, #tpu.memory_space<vmem>>
    tpu.wait_dma2 semaphore(%arg5 : memref<!tpu.dma_semaphore, #tpu.memory_space<semaphore_mem>>) src(%195 : memref<1x128xf32, #tpu.memory_space<any>>) dst(%197 : memref<1x128xf32, #tpu.memory_space<vmem>>)
    %c0_i32_247 = arith.constant 0 : i32
    %c0_i32_248 = arith.constant 0 : i32
    %198 = tpu.memref_slice %arg2[%14, %c0_i32_248] : memref<2000x128xf32, #tpu.memory_space<any>> -> memref<1x128xf32, #tpu.memory_space<any>>
    %c2_i32_249 = arith.constant 2 : i32
    %c0_i32_250 = arith.constant 0 : i32
    %199 = tpu.memref_slice %arg4[%c0_i32_247, %c2_i32_249, %c0_i32_250] : memref<8x4x128xf32, #tpu.memory_space<vmem>> -> memref<1x1x128xf32, #tpu.memory_space<vmem>>
    %200 = tpu.memref_squeeze %199 : memref<1x1x128xf32, #tpu.memory_space<vmem>> -> memref<1x128xf32, #tpu.memory_space<vmem>>
    tpu.wait_dma2 semaphore(%arg5 : memref<!tpu.dma_semaphore, #tpu.memory_space<semaphore_mem>>) src(%198 : memref<1x128xf32, #tpu.memory_space<any>>) dst(%200 : memref<1x128xf32, #tpu.memory_space<vmem>>)
    %c0_i32_251 = arith.constant 0 : i32
    %c0_i32_252 = arith.constant 0 : i32
    %201 = tpu.memref_slice %arg2[%20, %c0_i32_252] : memref<2000x128xf32, #tpu.memory_space<any>> -> memref<1x128xf32, #tpu.memory_space<any>>
    %c3_i32_253 = arith.constant 3 : i32
    %c0_i32_254 = arith.constant 0 : i32
    %202 = tpu.memref_slice %arg4[%c0_i32_251, %c3_i32_253, %c0_i32_254] : memref<8x4x128xf32, #tpu.memory_space<vmem>> -> memref<1x1x128xf32, #tpu.memory_space<vmem>>
    %203 = tpu.memref_squeeze %202 : memref<1x1x128xf32, #tpu.memory_space<vmem>> -> memref<1x128xf32, #tpu.memory_space<vmem>>
    tpu.wait_dma2 semaphore(%arg5 : memref<!tpu.dma_semaphore, #tpu.memory_space<semaphore_mem>>) src(%201 : memref<1x128xf32, #tpu.memory_space<any>>) dst(%203 : memref<1x128xf32, #tpu.memory_space<vmem>>)
    %c1_i32_255 = arith.constant 1 : i32
    %c0_i32_256 = arith.constant 0 : i32
    %204 = tpu.memref_slice %arg2[%26, %c0_i32_256] : memref<2000x128xf32, #tpu.memory_space<any>> -> memref<1x128xf32, #tpu.memory_space<any>>
    %c0_i32_257 = arith.constant 0 : i32
    %c0_i32_258 = arith.constant 0 : i32
    %205 = tpu.memref_slice %arg4[%c1_i32_255, %c0_i32_257, %c0_i32_258] : memref<8x4x128xf32, #tpu.memory_space<vmem>> -> memref<1x1x128xf32, #tpu.memory_space<vmem>>
    %206 = tpu.memref_squeeze %205 : memref<1x1x128xf32, #tpu.memory_space<vmem>> -> memref<1x128xf32, #tpu.memory_space<vmem>>
    tpu.wait_dma2 semaphore(%arg5 : memref<!tpu.dma_semaphore, #tpu.memory_space<semaphore_mem>>) src(%204 : memref<1x128xf32, #tpu.memory_space<any>>) dst(%206 : memref<1x128xf32, #tpu.memory_space<vmem>>)
    %c1_i32_259 = arith.constant 1 : i32
    %c0_i32_260 = arith.constant 0 : i32
    %207 = tpu.memref_slice %arg2[%32, %c0_i32_260] : memref<2000x128xf32, #tpu.memory_space<any>> -> memref<1x128xf32, #tpu.memory_space<any>>
    %c1_i32_261 = arith.constant 1 : i32
    %c0_i32_262 = arith.constant 0 : i32
    %208 = tpu.memref_slice %arg4[%c1_i32_259, %c1_i32_261, %c0_i32_262] : memref<8x4x128xf32, #tpu.memory_space<vmem>> -> memref<1x1x128xf32, #tpu.memory_space<vmem>>
    %209 = tpu.memref_squeeze %208 : memref<1x1x128xf32, #tpu.memory_space<vmem>> -> memref<1x128xf32, #tpu.memory_space<vmem>>
    tpu.wait_dma2 semaphore(%arg5 : memref<!tpu.dma_semaphore, #tpu.memory_space<semaphore_mem>>) src(%207 : memref<1x128xf32, #tpu.memory_space<any>>) dst(%209 : memref<1x128xf32, #tpu.memory_space<vmem>>)
    %c1_i32_263 = arith.constant 1 : i32
    %c0_i32_264 = arith.constant 0 : i32
    %210 = tpu.memref_slice %arg2[%38, %c0_i32_264] : memref<2000x128xf32, #tpu.memory_space<any>> -> memref<1x128xf32, #tpu.memory_space<any>>
    %c2_i32_265 = arith.constant 2 : i32
    %c0_i32_266 = arith.constant 0 : i32
    %211 = tpu.memref_slice %arg4[%c1_i32_263, %c2_i32_265, %c0_i32_266] : memref<8x4x128xf32, #tpu.memory_space<vmem>> -> memref<1x1x128xf32, #tpu.memory_space<vmem>>
    %212 = tpu.memref_squeeze %211 : memref<1x1x128xf32, #tpu.memory_space<vmem>> -> memref<1x128xf32, #tpu.memory_space<vmem>>
    tpu.wait_dma2 semaphore(%arg5 : memref<!tpu.dma_semaphore, #tpu.memory_space<semaphore_mem>>) src(%210 : memref<1x128xf32, #tpu.memory_space<any>>) dst(%212 : memref<1x128xf32, #tpu.memory_space<vmem>>)
    %c1_i32_267 = arith.constant 1 : i32
    %c0_i32_268 = arith.constant 0 : i32
    %213 = tpu.memref_slice %arg2[%44, %c0_i32_268] : memref<2000x128xf32, #tpu.memory_space<any>> -> memref<1x128xf32, #tpu.memory_space<any>>
    %c3_i32_269 = arith.constant 3 : i32
    %c0_i32_270 = arith.constant 0 : i32
    %214 = tpu.memref_slice %arg4[%c1_i32_267, %c3_i32_269, %c0_i32_270] : memref<8x4x128xf32, #tpu.memory_space<vmem>> -> memref<1x1x128xf32, #tpu.memory_space<vmem>>
    %215 = tpu.memref_squeeze %214 : memref<1x1x128xf32, #tpu.memory_space<vmem>> -> memref<1x128xf32, #tpu.memory_space<vmem>>
    tpu.wait_dma2 semaphore(%arg5 : memref<!tpu.dma_semaphore, #tpu.memory_space<semaphore_mem>>) src(%213 : memref<1x128xf32, #tpu.memory_space<any>>) dst(%215 : memref<1x128xf32, #tpu.memory_space<vmem>>)
    %c2_i32_271 = arith.constant 2 : i32
    %c0_i32_272 = arith.constant 0 : i32
    %216 = tpu.memref_slice %arg2[%50, %c0_i32_272] : memref<2000x128xf32, #tpu.memory_space<any>> -> memref<1x128xf32, #tpu.memory_space<any>>
    %c0_i32_273 = arith.constant 0 : i32
    %c0_i32_274 = arith.constant 0 : i32
    %217 = tpu.memref_slice %arg4[%c2_i32_271, %c0_i32_273, %c0_i32_274] : memref<8x4x128xf32, #tpu.memory_space<vmem>> -> memref<1x1x128xf32, #tpu.memory_space<vmem>>
    %218 = tpu.memref_squeeze %217 : memref<1x1x128xf32, #tpu.memory_space<vmem>> -> memref<1x128xf32, #tpu.memory_space<vmem>>
    tpu.wait_dma2 semaphore(%arg5 : memref<!tpu.dma_semaphore, #tpu.memory_space<semaphore_mem>>) src(%216 : memref<1x128xf32, #tpu.memory_space<any>>) dst(%218 : memref<1x128xf32, #tpu.memory_space<vmem>>)
    %c2_i32_275 = arith.constant 2 : i32
    %c0_i32_276 = arith.constant 0 : i32
    %219 = tpu.memref_slice %arg2[%56, %c0_i32_276] : memref<2000x128xf32, #tpu.memory_space<any>> -> memref<1x128xf32, #tpu.memory_space<any>>
    %c1_i32_277 = arith.constant 1 : i32
    %c0_i32_278 = arith.constant 0 : i32
    %220 = tpu.memref_slice %arg4[%c2_i32_275, %c1_i32_277, %c0_i32_278] : memref<8x4x128xf32, #tpu.memory_space<vmem>> -> memref<1x1x128xf32, #tpu.memory_space<vmem>>
    %221 = tpu.memref_squeeze %220 : memref<1x1x128xf32, #tpu.memory_space<vmem>> -> memref<1x128xf32, #tpu.memory_space<vmem>>
    tpu.wait_dma2 semaphore(%arg5 : memref<!tpu.dma_semaphore, #tpu.memory_space<semaphore_mem>>) src(%219 : memref<1x128xf32, #tpu.memory_space<any>>) dst(%221 : memref<1x128xf32, #tpu.memory_space<vmem>>)
    %c2_i32_279 = arith.constant 2 : i32
    %c0_i32_280 = arith.constant 0 : i32
    %222 = tpu.memref_slice %arg2[%62, %c0_i32_280] : memref<2000x128xf32, #tpu.memory_space<any>> -> memref<1x128xf32, #tpu.memory_space<any>>
    %c2_i32_281 = arith.constant 2 : i32
    %c0_i32_282 = arith.constant 0 : i32
    %223 = tpu.memref_slice %arg4[%c2_i32_279, %c2_i32_281, %c0_i32_282] : memref<8x4x128xf32, #tpu.memory_space<vmem>> -> memref<1x1x128xf32, #tpu.memory_space<vmem>>
    %224 = tpu.memref_squeeze %223 : memref<1x1x128xf32, #tpu.memory_space<vmem>> -> memref<1x128xf32, #tpu.memory_space<vmem>>
    tpu.wait_dma2 semaphore(%arg5 : memref<!tpu.dma_semaphore, #tpu.memory_space<semaphore_mem>>) src(%222 : memref<1x128xf32, #tpu.memory_space<any>>) dst(%224 : memref<1x128xf32, #tpu.memory_space<vmem>>)
    %c2_i32_283 = arith.constant 2 : i32
    %c0_i32_284 = arith.constant 0 : i32
    %225 = tpu.memref_slice %arg2[%68, %c0_i32_284] : memref<2000x128xf32, #tpu.memory_space<any>> -> memref<1x128xf32, #tpu.memory_space<any>>
    %c3_i32_285 = arith.constant 3 : i32
    %c0_i32_286 = arith.constant 0 : i32
    %226 = tpu.memref_slice %arg4[%c2_i32_283, %c3_i32_285, %c0_i32_286] : memref<8x4x128xf32, #tpu.memory_space<vmem>> -> memref<1x1x128xf32, #tpu.memory_space<vmem>>
    %227 = tpu.memref_squeeze %226 : memref<1x1x128xf32, #tpu.memory_space<vmem>> -> memref<1x128xf32, #tpu.memory_space<vmem>>
    tpu.wait_dma2 semaphore(%arg5 : memref<!tpu.dma_semaphore, #tpu.memory_space<semaphore_mem>>) src(%225 : memref<1x128xf32, #tpu.memory_space<any>>) dst(%227 : memref<1x128xf32, #tpu.memory_space<vmem>>)
    %c3_i32_287 = arith.constant 3 : i32
    %c0_i32_288 = arith.constant 0 : i32
    %228 = tpu.memref_slice %arg2[%74, %c0_i32_288] : memref<2000x128xf32, #tpu.memory_space<any>> -> memref<1x128xf32, #tpu.memory_space<any>>
    %c0_i32_289 = arith.constant 0 : i32
    %c0_i32_290 = arith.constant 0 : i32
    %229 = tpu.memref_slice %arg4[%c3_i32_287, %c0_i32_289, %c0_i32_290] : memref<8x4x128xf32, #tpu.memory_space<vmem>> -> memref<1x1x128xf32, #tpu.memory_space<vmem>>
    %230 = tpu.memref_squeeze %229 : memref<1x1x128xf32, #tpu.memory_space<vmem>> -> memref<1x128xf32, #tpu.memory_space<vmem>>
    tpu.wait_dma2 semaphore(%arg5 : memref<!tpu.dma_semaphore, #tpu.memory_space<semaphore_mem>>) src(%228 : memref<1x128xf32, #tpu.memory_space<any>>) dst(%230 : memref<1x128xf32, #tpu.memory_space<vmem>>)
    %c3_i32_291 = arith.constant 3 : i32
    %c0_i32_292 = arith.constant 0 : i32
    %231 = tpu.memref_slice %arg2[%80, %c0_i32_292] : memref<2000x128xf32, #tpu.memory_space<any>> -> memref<1x128xf32, #tpu.memory_space<any>>
    %c1_i32_293 = arith.constant 1 : i32
    %c0_i32_294 = arith.constant 0 : i32
    %232 = tpu.memref_slice %arg4[%c3_i32_291, %c1_i32_293, %c0_i32_294] : memref<8x4x128xf32, #tpu.memory_space<vmem>> -> memref<1x1x128xf32, #tpu.memory_space<vmem>>
    %233 = tpu.memref_squeeze %232 : memref<1x1x128xf32, #tpu.memory_space<vmem>> -> memref<1x128xf32, #tpu.memory_space<vmem>>
    tpu.wait_dma2 semaphore(%arg5 : memref<!tpu.dma_semaphore, #tpu.memory_space<semaphore_mem>>) src(%231 : memref<1x128xf32, #tpu.memory_space<any>>) dst(%233 : memref<1x128xf32, #tpu.memory_space<vmem>>)
    %c3_i32_295 = arith.constant 3 : i32
    %c0_i32_296 = arith.constant 0 : i32
    %234 = tpu.memref_slice %arg2[%86, %c0_i32_296] : memref<2000x128xf32, #tpu.memory_space<any>> -> memref<1x128xf32, #tpu.memory_space<any>>
    %c2_i32_297 = arith.constant 2 : i32
    %c0_i32_298 = arith.constant 0 : i32
    %235 = tpu.memref_slice %arg4[%c3_i32_295, %c2_i32_297, %c0_i32_298] : memref<8x4x128xf32, #tpu.memory_space<vmem>> -> memref<1x1x128xf32, #tpu.memory_space<vmem>>
    %236 = tpu.memref_squeeze %235 : memref<1x1x128xf32, #tpu.memory_space<vmem>> -> memref<1x128xf32, #tpu.memory_space<vmem>>
    tpu.wait_dma2 semaphore(%arg5 : memref<!tpu.dma_semaphore, #tpu.memory_space<semaphore_mem>>) src(%234 : memref<1x128xf32, #tpu.memory_space<any>>) dst(%236 : memref<1x128xf32, #tpu.memory_space<vmem>>)
    %c3_i32_299 = arith.constant 3 : i32
    %c0_i32_300 = arith.constant 0 : i32
    %237 = tpu.memref_slice %arg2[%92, %c0_i32_300] : memref<2000x128xf32, #tpu.memory_space<any>> -> memref<1x128xf32, #tpu.memory_space<any>>
    %c3_i32_301 = arith.constant 3 : i32
    %c0_i32_302 = arith.constant 0 : i32
    %238 = tpu.memref_slice %arg4[%c3_i32_299, %c3_i32_301, %c0_i32_302] : memref<8x4x128xf32, #tpu.memory_space<vmem>> -> memref<1x1x128xf32, #tpu.memory_space<vmem>>
    %239 = tpu.memref_squeeze %238 : memref<1x1x128xf32, #tpu.memory_space<vmem>> -> memref<1x128xf32, #tpu.memory_space<vmem>>
    tpu.wait_dma2 semaphore(%arg5 : memref<!tpu.dma_semaphore, #tpu.memory_space<semaphore_mem>>) src(%237 : memref<1x128xf32, #tpu.memory_space<any>>) dst(%239 : memref<1x128xf32, #tpu.memory_space<vmem>>)
    %c4_i32_303 = arith.constant 4 : i32
    %c0_i32_304 = arith.constant 0 : i32
    %240 = tpu.memref_slice %arg2[%98, %c0_i32_304] : memref<2000x128xf32, #tpu.memory_space<any>> -> memref<1x128xf32, #tpu.memory_space<any>>
    %c0_i32_305 = arith.constant 0 : i32
    %c0_i32_306 = arith.constant 0 : i32
    %241 = tpu.memref_slice %arg4[%c4_i32_303, %c0_i32_305, %c0_i32_306] : memref<8x4x128xf32, #tpu.memory_space<vmem>> -> memref<1x1x128xf32, #tpu.memory_space<vmem>>
    %242 = tpu.memref_squeeze %241 : memref<1x1x128xf32, #tpu.memory_space<vmem>> -> memref<1x128xf32, #tpu.memory_space<vmem>>
    tpu.wait_dma2 semaphore(%arg5 : memref<!tpu.dma_semaphore, #tpu.memory_space<semaphore_mem>>) src(%240 : memref<1x128xf32, #tpu.memory_space<any>>) dst(%242 : memref<1x128xf32, #tpu.memory_space<vmem>>)
    %c4_i32_307 = arith.constant 4 : i32
    %c0_i32_308 = arith.constant 0 : i32
    %243 = tpu.memref_slice %arg2[%104, %c0_i32_308] : memref<2000x128xf32, #tpu.memory_space<any>> -> memref<1x128xf32, #tpu.memory_space<any>>
    %c1_i32_309 = arith.constant 1 : i32
    %c0_i32_310 = arith.constant 0 : i32
    %244 = tpu.memref_slice %arg4[%c4_i32_307, %c1_i32_309, %c0_i32_310] : memref<8x4x128xf32, #tpu.memory_space<vmem>> -> memref<1x1x128xf32, #tpu.memory_space<vmem>>
    %245 = tpu.memref_squeeze %244 : memref<1x1x128xf32, #tpu.memory_space<vmem>> -> memref<1x128xf32, #tpu.memory_space<vmem>>
    tpu.wait_dma2 semaphore(%arg5 : memref<!tpu.dma_semaphore, #tpu.memory_space<semaphore_mem>>) src(%243 : memref<1x128xf32, #tpu.memory_space<any>>) dst(%245 : memref<1x128xf32, #tpu.memory_space<vmem>>)
    %c4_i32_311 = arith.constant 4 : i32
    %c0_i32_312 = arith.constant 0 : i32
    %246 = tpu.memref_slice %arg2[%110, %c0_i32_312] : memref<2000x128xf32, #tpu.memory_space<any>> -> memref<1x128xf32, #tpu.memory_space<any>>
    %c2_i32_313 = arith.constant 2 : i32
    %c0_i32_314 = arith.constant 0 : i32
    %247 = tpu.memref_slice %arg4[%c4_i32_311, %c2_i32_313, %c0_i32_314] : memref<8x4x128xf32, #tpu.memory_space<vmem>> -> memref<1x1x128xf32, #tpu.memory_space<vmem>>
    %248 = tpu.memref_squeeze %247 : memref<1x1x128xf32, #tpu.memory_space<vmem>> -> memref<1x128xf32, #tpu.memory_space<vmem>>
    tpu.wait_dma2 semaphore(%arg5 : memref<!tpu.dma_semaphore, #tpu.memory_space<semaphore_mem>>) src(%246 : memref<1x128xf32, #tpu.memory_space<any>>) dst(%248 : memref<1x128xf32, #tpu.memory_space<vmem>>)
    %c4_i32_315 = arith.constant 4 : i32
    %c0_i32_316 = arith.constant 0 : i32
    %249 = tpu.memref_slice %arg2[%116, %c0_i32_316] : memref<2000x128xf32, #tpu.memory_space<any>> -> memref<1x128xf32, #tpu.memory_space<any>>
    %c3_i32_317 = arith.constant 3 : i32
    %c0_i32_318 = arith.constant 0 : i32
    %250 = tpu.memref_slice %arg4[%c4_i32_315, %c3_i32_317, %c0_i32_318] : memref<8x4x128xf32, #tpu.memory_space<vmem>> -> memref<1x1x128xf32, #tpu.memory_space<vmem>>
    %251 = tpu.memref_squeeze %250 : memref<1x1x128xf32, #tpu.memory_space<vmem>> -> memref<1x128xf32, #tpu.memory_space<vmem>>
    tpu.wait_dma2 semaphore(%arg5 : memref<!tpu.dma_semaphore, #tpu.memory_space<semaphore_mem>>) src(%249 : memref<1x128xf32, #tpu.memory_space<any>>) dst(%251 : memref<1x128xf32, #tpu.memory_space<vmem>>)
    %c5_i32_319 = arith.constant 5 : i32
    %c0_i32_320 = arith.constant 0 : i32
    %252 = tpu.memref_slice %arg2[%122, %c0_i32_320] : memref<2000x128xf32, #tpu.memory_space<any>> -> memref<1x128xf32, #tpu.memory_space<any>>
    %c0_i32_321 = arith.constant 0 : i32
    %c0_i32_322 = arith.constant 0 : i32
    %253 = tpu.memref_slice %arg4[%c5_i32_319, %c0_i32_321, %c0_i32_322] : memref<8x4x128xf32, #tpu.memory_space<vmem>> -> memref<1x1x128xf32, #tpu.memory_space<vmem>>
    %254 = tpu.memref_squeeze %253 : memref<1x1x128xf32, #tpu.memory_space<vmem>> -> memref<1x128xf32, #tpu.memory_space<vmem>>
    tpu.wait_dma2 semaphore(%arg5 : memref<!tpu.dma_semaphore, #tpu.memory_space<semaphore_mem>>) src(%252 : memref<1x128xf32, #tpu.memory_space<any>>) dst(%254 : memref<1x128xf32, #tpu.memory_space<vmem>>)
    %c5_i32_323 = arith.constant 5 : i32
    %c0_i32_324 = arith.constant 0 : i32
    %255 = tpu.memref_slice %arg2[%128, %c0_i32_324] : memref<2000x128xf32, #tpu.memory_space<any>> -> memref<1x128xf32, #tpu.memory_space<any>>
    %c1_i32_325 = arith.constant 1 : i32
    %c0_i32_326 = arith.constant 0 : i32
    %256 = tpu.memref_slice %arg4[%c5_i32_323, %c1_i32_325, %c0_i32_326] : memref<8x4x128xf32, #tpu.memory_space<vmem>> -> memref<1x1x128xf32, #tpu.memory_space<vmem>>
    %257 = tpu.memref_squeeze %256 : memref<1x1x128xf32, #tpu.memory_space<vmem>> -> memref<1x128xf32, #tpu.memory_space<vmem>>
    tpu.wait_dma2 semaphore(%arg5 : memref<!tpu.dma_semaphore, #tpu.memory_space<semaphore_mem>>) src(%255 : memref<1x128xf32, #tpu.memory_space<any>>) dst(%257 : memref<1x128xf32, #tpu.memory_space<vmem>>)
    %c5_i32_327 = arith.constant 5 : i32
    %c0_i32_328 = arith.constant 0 : i32
    %258 = tpu.memref_slice %arg2[%134, %c0_i32_328] : memref<2000x128xf32, #tpu.memory_space<any>> -> memref<1x128xf32, #tpu.memory_space<any>>
    %c2_i32_329 = arith.constant 2 : i32
    %c0_i32_330 = arith.constant 0 : i32
    %259 = tpu.memref_slice %arg4[%c5_i32_327, %c2_i32_329, %c0_i32_330] : memref<8x4x128xf32, #tpu.memory_space<vmem>> -> memref<1x1x128xf32, #tpu.memory_space<vmem>>
    %260 = tpu.memref_squeeze %259 : memref<1x1x128xf32, #tpu.memory_space<vmem>> -> memref<1x128xf32, #tpu.memory_space<vmem>>
    tpu.wait_dma2 semaphore(%arg5 : memref<!tpu.dma_semaphore, #tpu.memory_space<semaphore_mem>>) src(%258 : memref<1x128xf32, #tpu.memory_space<any>>) dst(%260 : memref<1x128xf32, #tpu.memory_space<vmem>>)
    %c5_i32_331 = arith.constant 5 : i32
    %c0_i32_332 = arith.constant 0 : i32
    %261 = tpu.memref_slice %arg2[%140, %c0_i32_332] : memref<2000x128xf32, #tpu.memory_space<any>> -> memref<1x128xf32, #tpu.memory_space<any>>
    %c3_i32_333 = arith.constant 3 : i32
    %c0_i32_334 = arith.constant 0 : i32
    %262 = tpu.memref_slice %arg4[%c5_i32_331, %c3_i32_333, %c0_i32_334] : memref<8x4x128xf32, #tpu.memory_space<vmem>> -> memref<1x1x128xf32, #tpu.memory_space<vmem>>
    %263 = tpu.memref_squeeze %262 : memref<1x1x128xf32, #tpu.memory_space<vmem>> -> memref<1x128xf32, #tpu.memory_space<vmem>>
    tpu.wait_dma2 semaphore(%arg5 : memref<!tpu.dma_semaphore, #tpu.memory_space<semaphore_mem>>) src(%261 : memref<1x128xf32, #tpu.memory_space<any>>) dst(%263 : memref<1x128xf32, #tpu.memory_space<vmem>>)
    %c6_i32_335 = arith.constant 6 : i32
    %c0_i32_336 = arith.constant 0 : i32
    %264 = tpu.memref_slice %arg2[%146, %c0_i32_336] : memref<2000x128xf32, #tpu.memory_space<any>> -> memref<1x128xf32, #tpu.memory_space<any>>
    %c0_i32_337 = arith.constant 0 : i32
    %c0_i32_338 = arith.constant 0 : i32
    %265 = tpu.memref_slice %arg4[%c6_i32_335, %c0_i32_337, %c0_i32_338] : memref<8x4x128xf32, #tpu.memory_space<vmem>> -> memref<1x1x128xf32, #tpu.memory_space<vmem>>
    %266 = tpu.memref_squeeze %265 : memref<1x1x128xf32, #tpu.memory_space<vmem>> -> memref<1x128xf32, #tpu.memory_space<vmem>>
    tpu.wait_dma2 semaphore(%arg5 : memref<!tpu.dma_semaphore, #tpu.memory_space<semaphore_mem>>) src(%264 : memref<1x128xf32, #tpu.memory_space<any>>) dst(%266 : memref<1x128xf32, #tpu.memory_space<vmem>>)
    %c6_i32_339 = arith.constant 6 : i32
    %c0_i32_340 = arith.constant 0 : i32
    %267 = tpu.memref_slice %arg2[%152, %c0_i32_340] : memref<2000x128xf32, #tpu.memory_space<any>> -> memref<1x128xf32, #tpu.memory_space<any>>
    %c1_i32_341 = arith.constant 1 : i32
    %c0_i32_342 = arith.constant 0 : i32
    %268 = tpu.memref_slice %arg4[%c6_i32_339, %c1_i32_341, %c0_i32_342] : memref<8x4x128xf32, #tpu.memory_space<vmem>> -> memref<1x1x128xf32, #tpu.memory_space<vmem>>
    %269 = tpu.memref_squeeze %268 : memref<1x1x128xf32, #tpu.memory_space<vmem>> -> memref<1x128xf32, #tpu.memory_space<vmem>>
    tpu.wait_dma2 semaphore(%arg5 : memref<!tpu.dma_semaphore, #tpu.memory_space<semaphore_mem>>) src(%267 : memref<1x128xf32, #tpu.memory_space<any>>) dst(%269 : memref<1x128xf32, #tpu.memory_space<vmem>>)
    %c6_i32_343 = arith.constant 6 : i32
    %c0_i32_344 = arith.constant 0 : i32
    %270 = tpu.memref_slice %arg2[%158, %c0_i32_344] : memref<2000x128xf32, #tpu.memory_space<any>> -> memref<1x128xf32, #tpu.memory_space<any>>
    %c2_i32_345 = arith.constant 2 : i32
    %c0_i32_346 = arith.constant 0 : i32
    %271 = tpu.memref_slice %arg4[%c6_i32_343, %c2_i32_345, %c0_i32_346] : memref<8x4x128xf32, #tpu.memory_space<vmem>> -> memref<1x1x128xf32, #tpu.memory_space<vmem>>
    %272 = tpu.memref_squeeze %271 : memref<1x1x128xf32, #tpu.memory_space<vmem>> -> memref<1x128xf32, #tpu.memory_space<vmem>>
    tpu.wait_dma2 semaphore(%arg5 : memref<!tpu.dma_semaphore, #tpu.memory_space<semaphore_mem>>) src(%270 : memref<1x128xf32, #tpu.memory_space<any>>) dst(%272 : memref<1x128xf32, #tpu.memory_space<vmem>>)
    %c6_i32_347 = arith.constant 6 : i32
    %c0_i32_348 = arith.constant 0 : i32
    %273 = tpu.memref_slice %arg2[%164, %c0_i32_348] : memref<2000x128xf32, #tpu.memory_space<any>> -> memref<1x128xf32, #tpu.memory_space<any>>
    %c3_i32_349 = arith.constant 3 : i32
    %c0_i32_350 = arith.constant 0 : i32
    %274 = tpu.memref_slice %arg4[%c6_i32_347, %c3_i32_349, %c0_i32_350] : memref<8x4x128xf32, #tpu.memory_space<vmem>> -> memref<1x1x128xf32, #tpu.memory_space<vmem>>
    %275 = tpu.memref_squeeze %274 : memref<1x1x128xf32, #tpu.memory_space<vmem>> -> memref<1x128xf32, #tpu.memory_space<vmem>>
    tpu.wait_dma2 semaphore(%arg5 : memref<!tpu.dma_semaphore, #tpu.memory_space<semaphore_mem>>) src(%273 : memref<1x128xf32, #tpu.memory_space<any>>) dst(%275 : memref<1x128xf32, #tpu.memory_space<vmem>>)
    %c7_i32_351 = arith.constant 7 : i32
    %c0_i32_352 = arith.constant 0 : i32
    %276 = tpu.memref_slice %arg2[%170, %c0_i32_352] : memref<2000x128xf32, #tpu.memory_space<any>> -> memref<1x128xf32, #tpu.memory_space<any>>
    %c0_i32_353 = arith.constant 0 : i32
    %c0_i32_354 = arith.constant 0 : i32
    %277 = tpu.memref_slice %arg4[%c7_i32_351, %c0_i32_353, %c0_i32_354] : memref<8x4x128xf32, #tpu.memory_space<vmem>> -> memref<1x1x128xf32, #tpu.memory_space<vmem>>
    %278 = tpu.memref_squeeze %277 : memref<1x1x128xf32, #tpu.memory_space<vmem>> -> memref<1x128xf32, #tpu.memory_space<vmem>>
    tpu.wait_dma2 semaphore(%arg5 : memref<!tpu.dma_semaphore, #tpu.memory_space<semaphore_mem>>) src(%276 : memref<1x128xf32, #tpu.memory_space<any>>) dst(%278 : memref<1x128xf32, #tpu.memory_space<vmem>>)
    %c7_i32_355 = arith.constant 7 : i32
    %c0_i32_356 = arith.constant 0 : i32
    %279 = tpu.memref_slice %arg2[%176, %c0_i32_356] : memref<2000x128xf32, #tpu.memory_space<any>> -> memref<1x128xf32, #tpu.memory_space<any>>
    %c1_i32_357 = arith.constant 1 : i32
    %c0_i32_358 = arith.constant 0 : i32
    %280 = tpu.memref_slice %arg4[%c7_i32_355, %c1_i32_357, %c0_i32_358] : memref<8x4x128xf32, #tpu.memory_space<vmem>> -> memref<1x1x128xf32, #tpu.memory_space<vmem>>
    %281 = tpu.memref_squeeze %280 : memref<1x1x128xf32, #tpu.memory_space<vmem>> -> memref<1x128xf32, #tpu.memory_space<vmem>>
    tpu.wait_dma2 semaphore(%arg5 : memref<!tpu.dma_semaphore, #tpu.memory_space<semaphore_mem>>) src(%279 : memref<1x128xf32, #tpu.memory_space<any>>) dst(%281 : memref<1x128xf32, #tpu.memory_space<vmem>>)
    %c7_i32_359 = arith.constant 7 : i32
    %c0_i32_360 = arith.constant 0 : i32
    %282 = tpu.memref_slice %arg2[%182, %c0_i32_360] : memref<2000x128xf32, #tpu.memory_space<any>> -> memref<1x128xf32, #tpu.memory_space<any>>
    %c2_i32_361 = arith.constant 2 : i32
    %c0_i32_362 = arith.constant 0 : i32
    %283 = tpu.memref_slice %arg4[%c7_i32_359, %c2_i32_361, %c0_i32_362] : memref<8x4x128xf32, #tpu.memory_space<vmem>> -> memref<1x1x128xf32, #tpu.memory_space<vmem>>
    %284 = tpu.memref_squeeze %283 : memref<1x1x128xf32, #tpu.memory_space<vmem>> -> memref<1x128xf32, #tpu.memory_space<vmem>>
    tpu.wait_dma2 semaphore(%arg5 : memref<!tpu.dma_semaphore, #tpu.memory_space<semaphore_mem>>) src(%282 : memref<1x128xf32, #tpu.memory_space<any>>) dst(%284 : memref<1x128xf32, #tpu.memory_space<vmem>>)
    %c7_i32_363 = arith.constant 7 : i32
    %c0_i32_364 = arith.constant 0 : i32
    %285 = tpu.memref_slice %arg2[%188, %c0_i32_364] : memref<2000x128xf32, #tpu.memory_space<any>> -> memref<1x128xf32, #tpu.memory_space<any>>
    %c3_i32_365 = arith.constant 3 : i32
    %c0_i32_366 = arith.constant 0 : i32
    %286 = tpu.memref_slice %arg4[%c7_i32_363, %c3_i32_365, %c0_i32_366] : memref<8x4x128xf32, #tpu.memory_space<vmem>> -> memref<1x1x128xf32, #tpu.memory_space<vmem>>
    %287 = tpu.memref_squeeze %286 : memref<1x1x128xf32, #tpu.memory_space<vmem>> -> memref<1x128xf32, #tpu.memory_space<vmem>>
    tpu.wait_dma2 semaphore(%arg5 : memref<!tpu.dma_semaphore, #tpu.memory_space<semaphore_mem>>) src(%285 : memref<1x128xf32, #tpu.memory_space<any>>) dst(%287 : memref<1x128xf32, #tpu.memory_space<vmem>>)
    %c0_367 = arith.constant 0 : index
    %c0_368 = arith.constant 0 : index
    %c0_369 = arith.constant 0 : index
    %288 = vector.load %arg4[%c0_367, %c0_368, %c0_369] : memref<8x4x128xf32, #tpu.memory_space<vmem>>, vector<1x4x128xf32>
    %289 = vector.shape_cast %288 : vector<1x4x128xf32> to vector<4x128xf32>
    %c1_370 = arith.constant 1 : index
    %c0_371 = arith.constant 0 : index
    %c0_372 = arith.constant 0 : index
    %290 = vector.load %arg4[%c1_370, %c0_371, %c0_372] : memref<8x4x128xf32, #tpu.memory_space<vmem>>, vector<1x4x128xf32>
    %291 = vector.shape_cast %290 : vector<1x4x128xf32> to vector<4x128xf32>
    %292 = arith.addf %289, %291 : vector<4x128xf32>
    %c2_373 = arith.constant 2 : index
    %c0_374 = arith.constant 0 : index
    %c0_375 = arith.constant 0 : index
    %293 = vector.load %arg4[%c2_373, %c0_374, %c0_375] : memref<8x4x128xf32, #tpu.memory_space<vmem>>, vector<1x4x128xf32>
    %294 = vector.shape_cast %293 : vector<1x4x128xf32> to vector<4x128xf32>
    %295 = arith.addf %292, %294 : vector<4x128xf32>
    %c3_376 = arith.constant 3 : index
    %c0_377 = arith.constant 0 : index
    %c0_378 = arith.constant 0 : index
    %296 = vector.load %arg4[%c3_376, %c0_377, %c0_378] : memref<8x4x128xf32, #tpu.memory_space<vmem>>, vector<1x4x128xf32>
    %297 = vector.shape_cast %296 : vector<1x4x128xf32> to vector<4x128xf32>
    %298 = arith.addf %295, %297 : vector<4x128xf32>
    %c4_379 = arith.constant 4 : index
    %c0_380 = arith.constant 0 : index
    %c0_381 = arith.constant 0 : index
    %299 = vector.load %arg4[%c4_379, %c0_380, %c0_381] : memref<8x4x128xf32, #tpu.memory_space<vmem>>, vector<1x4x128xf32>
    %300 = vector.shape_cast %299 : vector<1x4x128xf32> to vector<4x128xf32>
    %301 = arith.addf %298, %300 : vector<4x128xf32>
    %c5_382 = arith.constant 5 : index
    %c0_383 = arith.constant 0 : index
    %c0_384 = arith.constant 0 : index
    %302 = vector.load %arg4[%c5_382, %c0_383, %c0_384] : memref<8x4x128xf32, #tpu.memory_space<vmem>>, vector<1x4x128xf32>
    %303 = vector.shape_cast %302 : vector<1x4x128xf32> to vector<4x128xf32>
    %304 = arith.addf %301, %303 : vector<4x128xf32>
    %c6_385 = arith.constant 6 : index
    %c0_386 = arith.constant 0 : index
    %c0_387 = arith.constant 0 : index
    %305 = vector.load %arg4[%c6_385, %c0_386, %c0_387] : memref<8x4x128xf32, #tpu.memory_space<vmem>>, vector<1x4x128xf32>
    %306 = vector.shape_cast %305 : vector<1x4x128xf32> to vector<4x128xf32>
    %307 = arith.addf %304, %306 : vector<4x128xf32>
    %c7_388 = arith.constant 7 : index
    %c0_389 = arith.constant 0 : index
    %c0_390 = arith.constant 0 : index
    %308 = vector.load %arg4[%c7_388, %c0_389, %c0_390] : memref<8x4x128xf32, #tpu.memory_space<vmem>>, vector<1x4x128xf32>
    %309 = vector.shape_cast %308 : vector<1x4x128xf32> to vector<4x128xf32>
    %310 = arith.addf %307, %309 : vector<4x128xf32>
    %cst = arith.constant 1.250000e-01 : f32
    %311 = vector.broadcast %cst : f32 to vector<4x128xf32>
    %312 = arith.mulf %310, %311 : vector<4x128xf32>
    %c0_391 = arith.constant 0 : index
    %c0_392 = arith.constant 0 : index
    %313 = vector.load %arg3[%c0_391, %c0_392] : memref<4x128xf32, #tpu.memory_space<vmem>>, vector<4x128xf32>
    tpu.vector_store %arg3[%c0_391, %c0_392], %312 {strides = array<i32>} : memref<4x128xf32, #tpu.memory_space<vmem>>, vector<4x128xf32>,
    return
  }
  func.func @transform_1(%arg0: i32, %arg1: memref<4x8xi32, #tpu.memory_space<smem>>) -> (i32, i32) {
    %c0_i32 = arith.constant 0 : i32
    %c0_i32_0 = arith.constant 0 : i32
    %c0_i32_1 = arith.constant 0 : i32
    return %c0_i32, %c0_i32_0 : i32, i32
  }
}

</mosaic_0001>

<llo_original>
// kernel: tpu_custom_call.1
$region0: #{tpu_custom_call.1}
  #allocation0 [shape = 'u32[]', space=smem, size = 0x4, offset = 0x4, fixed_abs, tag = 'smem constant byte address 0x4 - core index']
  #allocation1 [shape = 'u32[144,128]{1,0:T(1,128)}', space=vmem, size = 0x12000, scoped, tag = 'internal scratch']
  #allocation2 [shape = 'f32[8,4,128]{2,1,0:T(4,128)}', space=vmem, size = 0x4000, scoped, tag = 'scratch operand']
  #allocation3 [shape = 's32[1]{0}', space=sflag, size = 0x4, scoped, tag = 'scratch operand']
  #allocation4 [shape = 's32[1]{0}', space=sflag, size = 0x4, scoped, tag = 'scoped memory for tpu_custom_call.1']
  #allocation5 [shape = 'u8[2048]{0}', space=smem, size = 0x800, scoped, tag = 'prefetched SMEM operand 0']
  #allocation8 [shape = 's32[]', space=sflag, size = 0x4, offset = 0, fixed_abs, tag = 'sflag constant byte address 0x0 - dummy sync flag']
  #allocation9 [shape = 's32[]', space=sflag, size = 0x4, offset = 0, fixed_abs, tag = 'sflag constant byte address 0x0 - dummy sync flag']
  #allocation10 [shape = 'u32[]', space=smem, size = 0x4, offset = 0x44, fixed_abs, tag = 'smem constant byte address 0x44 - assertion arg 0']
  #allocation11 [shape = 'u32[]', space=smem, size = 0x4, offset = 0x48, fixed_abs, tag = 'smem constant byte address 0x48 - assertion arg 1']
  #allocation12 [shape = 's32[]', space=sflag, size = 0x4, offset = 0, fixed_abs, tag = 'sflag constant byte address 0x0 - dummy sync flag']
  #allocation13 [shape = 's32[]', space=sflag, size = 0x4, offset = 0, fixed_abs, tag = 'sflag constant byte address 0x0 - dummy sync flag']
  #allocation14 [shape = 's32[]', space=sflag, size = 0x4, offset = 0, fixed_abs, tag = 'sflag constant byte address 0x0 - dummy sync flag']
  #allocation15 [shape = 's32[]', space=sflag, size = 0x4, offset = 0, fixed_abs, tag = 'sflag constant byte address 0x0 - dummy sync flag']
  #allocation16 [shape = 's32[]', space=sflag, size = 0x4, offset = 0, fixed_abs, tag = 'sflag constant byte address 0x0 - dummy sync flag']
  #allocation17 [shape = 's32[]', space=sflag, size = 0x4, offset = 0, fixed_abs, tag = 'sflag constant byte address 0x0 - dummy sync flag']
  #allocation18 [shape = 's32[]', space=sflag, size = 0x4, offset = 0, fixed_abs, tag = 'sflag constant byte address 0x0 - dummy sync flag']
  #allocation19 [shape = 's32[]', space=sflag, size = 0x4, offset = 0, fixed_abs, tag = 'sflag constant byte address 0x0 - dummy sync flag']
  #allocation20 [shape = 's32[]', space=sflag, size = 0x4, offset = 0, fixed_abs, tag = 'sflag constant byte address 0x0 - dummy sync flag']
  #allocation21 [shape = 's32[]', space=sflag, size = 0x4, offset = 0, fixed_abs, tag = 'sflag constant byte address 0x0 - dummy sync flag']
  #allocation22 [shape = 's32[]', space=sflag, size = 0x4, offset = 0, fixed_abs, tag = 'sflag constant byte address 0x0 - dummy sync flag']
  #allocation23 [shape = 's32[]', space=sflag, size = 0x4, offset = 0, fixed_abs, tag = 'sflag constant byte address 0x0 - dummy sync flag']
  #allocation24 [shape = 's32[]', space=sflag, size = 0x4, offset = 0, fixed_abs, tag = 'sflag constant byte address 0x0 - dummy sync flag']
  #allocation25 [shape = 's32[]', space=sflag, size = 0x4, offset = 0, fixed_abs, tag = 'sflag constant byte address 0x0 - dummy sync flag']
  #allocation26 [shape = 's32[]', space=sflag, size = 0x4, offset = 0, fixed_abs, tag = 'sflag constant byte address 0x0 - dummy sync flag']
  #allocation27 [shape = 's32[]', space=sflag, size = 0x4, offset = 0, fixed_abs, tag = 'sflag constant byte address 0x0 - dummy sync flag']
  #allocation28 [shape = 's32[]', space=sflag, size = 0x4, offset = 0, fixed_abs, tag = 'sflag constant byte address 0x0 - dummy sync flag']
  #allocation29 [shape = 's32[]', space=sflag, size = 0x4, offset = 0, fixed_abs, tag = 'sflag constant byte address 0x0 - dummy sync flag']
  #allocation30 [shape = 's32[]', space=sflag, size = 0x4, offset = 0, fixed_abs, tag = 'sflag constant byte address 0x0 - dummy sync flag']
  #allocation31 [shape = 's32[]', space=sflag, size = 0x4, offset = 0, fixed_abs, tag = 'sflag constant byte address 0x0 - dummy sync flag']
  #allocation32 [shape = 's32[]', space=sflag, size = 0x4, offset = 0, fixed_abs, tag = 'sflag constant byte address 0x0 - dummy sync flag']
  #allocation33 [shape = 's32[]', space=sflag, size = 0x4, offset = 0, fixed_abs, tag = 'sflag constant byte address 0x0 - dummy sync flag']
  #allocation34 [shape = 's32[]', space=sflag, size = 0x4, offset = 0, fixed_abs, tag = 'sflag constant byte address 0x0 - dummy sync flag']
  #allocation35 [shape = 's32[]', space=sflag, size = 0x4, offset = 0, fixed_abs, tag = 'sflag constant byte address 0x0 - dummy sync flag']
  #allocation36 [shape = 's32[]', space=sflag, size = 0x4, offset = 0, fixed_abs, tag = 'sflag constant byte address 0x0 - dummy sync flag']
  #allocation37 [shape = 's32[]', space=sflag, size = 0x4, offset = 0, fixed_abs, tag = 'sflag constant byte address 0x0 - dummy sync flag']
  #allocation38 [shape = 's32[]', space=sflag, size = 0x4, offset = 0, fixed_abs, tag = 'sflag constant byte address 0x0 - dummy sync flag']
  #allocation39 [shape = 's32[]', space=sflag, size = 0x4, offset = 0, fixed_abs, tag = 'sflag constant byte address 0x0 - dummy sync flag']
  #allocation40 [shape = 's32[]', space=sflag, size = 0x4, offset = 0, fixed_abs, tag = 'sflag constant byte address 0x0 - dummy sync flag']
  #allocation41 [shape = 's32[]', space=sflag, size = 0x4, offset = 0, fixed_abs, tag = 'sflag constant byte address 0x0 - dummy sync flag']
  #allocation42 [shape = 's32[]', space=sflag, size = 0x4, offset = 0, fixed_abs, tag = 'sflag constant byte address 0x0 - dummy sync flag']
  #allocation43 [shape = 's32[]', space=sflag, size = 0x4, offset = 0, fixed_abs, tag = 'sflag constant byte address 0x0 - dummy sync flag']
  #allocation44 [shape = 's32[]', space=sflag, size = 0x4, offset = 0, fixed_abs, tag = 'sflag constant byte address 0x0 - dummy sync flag']
  #allocation45 [shape = 's32[]', space=sflag, size = 0x4, offset = 0, fixed_abs, tag = 'sflag constant byte address 0x0 - dummy sync flag']
  #allocation46 [shape = 's32[]', space=sflag, size = 0x4, offset = 0, fixed_abs, tag = 'sflag constant byte address 0x0 - dummy sync flag']
  #allocation47 [shape = 's32[]', space=sflag, size = 0x4, offset = 0, fixed_abs, tag = 'sflag constant byte address 0x0 - dummy sync flag']
  #allocation48 [shape = 's32[]', space=sflag, size = 0x4, offset = 0, fixed_abs, tag = 'sflag constant byte address 0x0 - dummy sync flag']
  #allocation49 [shape = 's32[]', space=sflag, size = 0x4, offset = 0, fixed_abs, tag = 'sflag constant byte address 0x0 - dummy sync flag']
  #allocation50 [shape = 's32[]', space=sflag, size = 0x4, offset = 0, fixed_abs, tag = 'sflag constant byte address 0x0 - dummy sync flag']
  #allocation51 [shape = 's32[]', space=sflag, size = 0x4, offset = 0, fixed_abs, tag = 'sflag constant byte address 0x0 - dummy sync flag']
  #allocation52 [shape = 's32[]', space=sflag, size = 0x4, offset = 0, fixed_abs, tag = 'sflag constant byte address 0x0 - dummy sync flag']
  #allocation53 [shape = 's32[]', space=sflag, size = 0x4, offset = 0, fixed_abs, tag = 'sflag constant byte address 0x0 - dummy sync flag']
  #allocation54 [shape = 's32[]', space=sflag, size = 0x4, offset = 0, fixed_abs, tag = 'sflag constant byte address 0x0 - dummy sync flag']
  #allocation55 [shape = 's32[]', space=sflag, size = 0x4, offset = 0, fixed_abs, tag = 'sflag constant byte address 0x0 - dummy sync flag']
  #allocation56 [shape = 's32[]', space=sflag, size = 0x4, offset = 0, fixed_abs, tag = 'sflag constant byte address 0x0 - dummy sync flag']
  #allocation57 [shape = 's32[]', space=sflag, size = 0x4, offset = 0, fixed_abs, tag = 'sflag constant byte address 0x0 - dummy sync flag']
  #allocation58 [shape = 's32[]', space=sflag, size = 0x4, offset = 0, fixed_abs, tag = 'sflag constant byte address 0x0 - dummy sync flag']
  #allocation59 [shape = 's32[]', space=sflag, size = 0x4, offset = 0, fixed_abs, tag = 'sflag constant byte address 0x0 - dummy sync flag']
  #allocation60 [shape = 's32[]', space=sflag, size = 0x4, offset = 0, fixed_abs, tag = 'sflag constant byte address 0x0 - dummy sync flag']
  #allocation61 [shape = 's32[]', space=sflag, size = 0x4, offset = 0, fixed_abs, tag = 'sflag constant byte address 0x0 - dummy sync flag']
  #allocation62 [shape = 's32[]', space=sflag, size = 0x4, offset = 0, fixed_abs, tag = 'sflag constant byte address 0x0 - dummy sync flag']
  #allocation63 [shape = 's32[]', space=sflag, size = 0x4, offset = 0, fixed_abs, tag = 'sflag constant byte address 0x0 - dummy sync flag']
  #allocation64 [shape = 's32[]', space=sflag, size = 0x4, offset = 0, fixed_abs, tag = 'sflag constant byte address 0x0 - dummy sync flag']
  #allocation65 [shape = 's32[]', space=sflag, size = 0x4, offset = 0, fixed_abs, tag = 'sflag constant byte address 0x0 - dummy sync flag']
  #allocation66 [shape = 's32[]', space=sflag, size = 0x4, offset = 0, fixed_abs, tag = 'sflag constant byte address 0x0 - dummy sync flag']
  #allocation67 [shape = 's32[]', space=sflag, size = 0x4, offset = 0, fixed_abs, tag = 'sflag constant byte address 0x0 - dummy sync flag']
  #allocation68 [shape = 's32[]', space=sflag, size = 0x4, offset = 0, fixed_abs, tag = 'sflag constant byte address 0x0 - dummy sync flag']
  #allocation69 [shape = 's32[]', space=sflag, size = 0x4, offset = 0, fixed_abs, tag = 'sflag constant byte address 0x0 - dummy sync flag']
  #allocation70 [shape = 's32[]', space=sflag, size = 0x4, offset = 0, fixed_abs, tag = 'sflag constant byte address 0x0 - dummy sync flag']
  #allocation71 [shape = 's32[]', space=sflag, size = 0x4, offset = 0, fixed_abs, tag = 'sflag constant byte address 0x0 - dummy sync flag']
  #allocation72 [shape = 's32[]', space=sflag, size = 0x4, offset = 0, fixed_abs, tag = 'sflag constant byte address 0x0 - dummy sync flag']
  #allocation73 [shape = 's32[]', space=sflag, size = 0x4, offset = 0, fixed_abs, tag = 'sflag constant byte address 0x0 - dummy sync flag']
  %s0 = inlined_call_operand.hbm [shape: s32[4,8], index: 0, kind: input, shape index: {}]
  %s1 = inlined_call_operand.hbm [shape: f32[2000,128], index: 1, kind: input, shape index: {}]
  %s2 = inlined_call_operand.hbm [shape: f32[4,128], index: 2, kind: output, shape index: {}]
  %s3 = sld [smem:[#allocation0]]
  $region138: #{tpu_custom_call.1} parent=0
    _
  %s5 = ssub.s32 1, %s3
  %s6 = scalar_select 0, %s5, %s3
  %8 = dma.hbm_to_smem %s0, 64, [#allocation5], [#allocation4]
  %9 = dma.done [#allocation4], 64
  %10 = sfence
  $region1: #{tpu_custom_call.1} parent=0
    #allocation6 [shape = 'u8[2048]{0}', space=vmem, size = 0x800, scoped, tag = 'output window, operand 0, single buffered']
    #allocation7 [shape = 's32[1]{0}', space=sflag, size = 0x4, scoped, tag = 'scoped memory for tpu_custom_call.1']
    %11 = vsyncpa [#allocation7], 0
    %s12 = sld [smem:[#allocation5]]
    %p13 = scmp.gt.s32.totalorder %s12, 0
    %s14 = scalar_select %p13, %s12, 0
    %p15 = scmp.lt.s32.totalorder %s14, 1999
    %s16 = scalar_select %p15, %s14, 1999
    %s17 = smul.addr %s16, 16
    %s18 = scalar_lea.hbm %s1, %s17
    // Predicated region
    $region2: #{tpu_custom_call.1} parent=1 // pred_check
      _
    $region3: #{tpu_custom_call.1} parent=1 // pred_check_branch
      %20 = sbr.rel target = $region5
    $region4: #{tpu_custom_call.1} parent=1 // pred_region
      %21 = sst [smem:[#allocation10]] [#allocation9]
      %22 = sst [smem:[#allocation11]] [#allocation8]
    $region5: #{tpu_custom_call.1} parent=1 // pred_fallthru
      _
    %24 = shalt.err (0)
    %s26 = sshll.u32 [#allocation2], 4
    %s27 = int_to_ptr.vmem [resolvable:$true] %s26
    %29 = dma.hbm_to_vmem [thread:$0]  %s18, 16, %s27, [#allocation3]
    %s30 = sld [smem:[#allocation5 + $0x80]]
    %p31 = scmp.gt.s32.totalorder %s30, 0
    %s32 = scalar_select %p31, %s30, 0
    %p33 = scmp.lt.s32.totalorder %s32, 1999
    %s34 = scalar_select %p33, %s32, 1999
    %s35 = smul.addr %s34, 16
    %s36 = scalar_lea.hbm %s1, %s35
    %s37 = scalar_lea.vmem [#allocation2], 1
    // Predicated region
    $region6: #{tpu_custom_call.1} parent=1 // pred_check
      _
    $region7: #{tpu_custom_call.1} parent=1 // pred_check_branch
      %39 = sbr.rel target = $region9
    $region8: #{tpu_custom_call.1} parent=1 // pred_region
      %40 = sst [smem:[#allocation10]] [#allocation13]
      %41 = sst [smem:[#allocation11]] [#allocation12]
    $region9: #{tpu_custom_call.1} parent=1 // pred_fallthru
      _
    %43 = shalt.err (0)
    %s45 = sshll.u32 %s37, 4
    %s46 = int_to_ptr.vmem [resolvable:$true] %s45
    %48 = dma.hbm_to_vmem [thread:$0]  %s36, 16, %s46, [#allocation3]
    %s49 = sld [smem:[#allocation5 + $0x100]]
    %p50 = scmp.gt.s32.totalorder %s49, 0
    %s51 = scalar_select %p50, %s49, 0
    %p52 = scmp.lt.s32.totalorder %s51, 1999
    %s53 = scalar_select %p52, %s51, 1999
    %s54 = smul.addr %s53, 16
    %s55 = scalar_lea.hbm %s1, %s54
    %s56 = scalar_lea.vmem [#allocation2], 2
    // Predicated region
    $region10: #{tpu_custom_call.1} parent=1 // pred_check
      _
    $region11: #{tpu_custom_call.1} parent=1 // pred_check_branch
      %58 = sbr.rel target = $region13
    $region12: #{tpu_custom_call.1} parent=1 // pred_region
      %59 = sst [smem:[#allocation10]] [#allocation15]
      %60 = sst [smem:[#allocation11]] [#allocation14]
    $region13: #{tpu_custom_call.1} parent=1 // pred_fallthru
      _
    %62 = shalt.err (0)
    %s64 = sshll.u32 %s56, 4
    %s65 = int_to_ptr.vmem [resolvable:$true] %s64
    %67 = dma.hbm_to_vmem [thread:$0]  %s55, 16, %s65, [#allocation3]
    %s68 = sld [smem:[#allocation5 + $0x180]]
    %p69 = scmp.gt.s32.totalorder %s68, 0
    %s70 = scalar_select %p69, %s68, 0
    %p71 = scmp.lt.s32.totalorder %s70, 1999
    %s72 = scalar_select %p71, %s70, 1999
    %s73 = smul.addr %s72, 16
    %s74 = scalar_lea.hbm %s1, %s73
    %s75 = scalar_lea.vmem [#allocation2], 3
    // Predicated region
    $region14: #{tpu_custom_call.1} parent=1 // pred_check
      _
    $region15: #{tpu_custom_call.1} parent=1 // pred_check_branch
      %77 = sbr.rel target = $region17
    $region16: #{tpu_custom_call.1} parent=1 // pred_region
      %78 = sst [smem:[#allocation10]] [#allocation17]
      %79 = sst [smem:[#allocation11]] [#allocation16]
    $region17: #{tpu_custom_call.1} parent=1 // pred_fallthru
      _
    %81 = shalt.err (0)
    %s83 = sshll.u32 %s75, 4
    %s84 = int_to_ptr.vmem [resolvable:$true] %s83
    %86 = dma.hbm_to_vmem [thread:$0]  %s74, 16, %s84, [#allocation3]
    %s87 = sld [smem:[#allocation5 + $0x1]]
    %p88 = scmp.gt.s32.totalorder %s87, 0
    %s89 = scalar_select %p88, %s87, 0
    %p90 = scmp.lt.s32.totalorder %s89, 1999
    %s91 = scalar_select %p90, %s89, 1999
    %s92 = smul.addr %s91, 16
    %s93 = scalar_lea.hbm %s1, %s92
    %s94 = scalar_lea.vmem [#allocation2], 4
    // Predicated region
    $region18: #{tpu_custom_call.1} parent=1 // pred_check
      _
    $region19: #{tpu_custom_call.1} parent=1 // pred_check_branch
      %96 = sbr.rel target = $region21
    $region20: #{tpu_custom_call.1} parent=1 // pred_region
      %97 = sst [smem:[#allocation10]] [#allocation19]
      %98 = sst [smem:[#allocation11]] [#allocation18]
    $region21: #{tpu_custom_call.1} parent=1 // pred_fallthru
      _
    %100 = shalt.err (0)
    %s102 = sshll.u32 %s94, 4
    %s103 = int_to_ptr.vmem [resolvable:$true] %s102
    %105 = dma.hbm_to_vmem [thread:$0]  %s93, 16, %s103, [#allocation3]
    %s106 = sld [smem:[#allocation5 + $0x81]]
    %p107 = scmp.gt.s32.totalorder %s106, 0
    %s108 = scalar_select %p107, %s106, 0
    %p109 = scmp.lt.s32.totalorder %s108, 1999
    %s110 = scalar_select %p109, %s108, 1999
    %s111 = smul.addr %s110, 16
    %s112 = scalar_lea.hbm %s1, %s111
    %s113 = scalar_lea.vmem [#allocation2], 5
    // Predicated region
    $region22: #{tpu_custom_call.1} parent=1 // pred_check
      _
    $region23: #{tpu_custom_call.1} parent=1 // pred_check_branch
      %115 = sbr.rel target = $region25
    $region24: #{tpu_custom_call.1} parent=1 // pred_region
      %116 = sst [smem:[#allocation10]] [#allocation21]
      %117 = sst [smem:[#allocation11]] [#allocation20]
    $region25: #{tpu_custom_call.1} parent=1 // pred_fallthru
      _
    %119 = shalt.err (0)
    %s121 = sshll.u32 %s113, 4
    %s122 = int_to_ptr.vmem [resolvable:$true] %s121
    %124 = dma.hbm_to_vmem [thread:$0]  %s112, 16, %s122, [#allocation3]
    %s125 = sld [smem:[#allocation5 + $0x101]]
    %p126 = scmp.gt.s32.totalorder %s125, 0
    %s127 = scalar_select %p126, %s125, 0
    %p128 = scmp.lt.s32.totalorder %s127, 1999
    %s129 = scalar_select %p128, %s127, 1999
    %s130 = smul.addr %s129, 16
    %s131 = scalar_lea.hbm %s1, %s130
    %s132 = scalar_lea.vmem [#allocation2], 6
    // Predicated region
    $region26: #{tpu_custom_call.1} parent=1 // pred_check
      _
    $region27: #{tpu_custom_call.1} parent=1 // pred_check_branch
      %134 = sbr.rel target = $region29
    $region28: #{tpu_custom_call.1} parent=1 // pred_region
      %135 = sst [smem:[#allocation10]] [#allocation23]
      %136 = sst [smem:[#allocation11]] [#allocation22]
    $region29: #{tpu_custom_call.1} parent=1 // pred_fallthru
      _
    %138 = shalt.err (0)
    %s140 = sshll.u32 %s132, 4
    %s141 = int_to_ptr.vmem [resolvable:$true] %s140
    %143 = dma.hbm_to_vmem [thread:$0]  %s131, 16, %s141, [#allocation3]
    %s144 = sld [smem:[#allocation5 + $0x181]]
    %p145 = scmp.gt.s32.totalorder %s144, 0
    %s146 = scalar_select %p145, %s144, 0
    %p147 = scmp.lt.s32.totalorder %s146, 1999
    %s148 = scalar_select %p147, %s146, 1999
    %s149 = smul.addr %s148, 16
    %s150 = scalar_lea.hbm %s1, %s149
    %s151 = scalar_lea.vmem [#allocation2], 7
    // Predicated region
    $region30: #{tpu_custom_call.1} parent=1 // pred_check
      _
    $region31: #{tpu_custom_call.1} parent=1 // pred_check_branch
      %153 = sbr.rel target = $region33
    $region32: #{tpu_custom_call.1} parent=1 // pred_region
      %154 = sst [smem:[#allocation10]] [#allocation25]
      %155 = sst [smem:[#allocation11]] [#allocation24]
    $region33: #{tpu_custom_call.1} parent=1 // pred_fallthru
      _
    %157 = shalt.err (0)
    %s159 = sshll.u32 %s151, 4
    %s160 = int_to_ptr.vmem [resolvable:$true] %s159
    %162 = dma.hbm_to_vmem [thread:$0]  %s150, 16, %s160, [#allocation3]
    %s163 = sld [smem:[#allocation5 + $0x2]]
    %p164 = scmp.gt.s32.totalorder %s163, 0
    %s165 = scalar_select %p164, %s163, 0
    %p166 = scmp.lt.s32.totalorder %s165, 1999
    %s167 = scalar_select %p166, %s165, 1999
    %s168 = smul.addr %s167, 16
    %s169 = scalar_lea.hbm %s1, %s168
    %s170 = scalar_lea.vmem [#allocation2], 8
    // Predicated region
    $region34: #{tpu_custom_call.1} parent=1 // pred_check
      _
    $region35: #{tpu_custom_call.1} parent=1 // pred_check_branch
      %172 = sbr.rel target = $region37
    $region36: #{tpu_custom_call.1} parent=1 // pred_region
      %173 = sst [smem:[#allocation10]] [#allocation27]
      %174 = sst [smem:[#allocation11]] [#allocation26]
    $region37: #{tpu_custom_call.1} parent=1 // pred_fallthru
      _
    %176 = shalt.err (0)
    %s178 = sshll.u32 %s170, 4
    %s179 = int_to_ptr.vmem [resolvable:$true] %s178
    %181 = dma.hbm_to_vmem [thread:$0]  %s169, 16, %s179, [#allocation3]
    %s182 = sld [smem:[#allocation5 + $0x82]]
    %p183 = scmp.gt.s32.totalorder %s182, 0
    %s184 = scalar_select %p183, %s182, 0
    %p185 = scmp.lt.s32.totalorder %s184, 1999
    %s186 = scalar_select %p185, %s184, 1999
    %s187 = smul.addr %s186, 16
    %s188 = scalar_lea.hbm %s1, %s187
    %s189 = scalar_lea.vmem [#allocation2], 9
    // Predicated region
    $region38: #{tpu_custom_call.1} parent=1 // pred_check
      _
    $region39: #{tpu_custom_call.1} parent=1 // pred_check_branch
      %191 = sbr.rel target = $region41
    $region40: #{tpu_custom_call.1} parent=1 // pred_region
      %192 = sst [smem:[#allocation10]] [#allocation29]
      %193 = sst [smem:[#allocation11]] [#allocation28]
    $region41: #{tpu_custom_call.1} parent=1 // pred_fallthru
      _
    %195 = shalt.err (0)
    %s197 = sshll.u32 %s189, 4
    %s198 = int_to_ptr.vmem [resolvable:$true] %s197
    %200 = dma.hbm_to_vmem [thread:$0]  %s188, 16, %s198, [#allocation3]
    %s201 = sld [smem:[#allocation5 + $0x102]]
    %p202 = scmp.gt.s32.totalorder %s201, 0
    %s203 = scalar_select %p202, %s201, 0
    %p204 = scmp.lt.s32.totalorder %s203, 1999
    %s205 = scalar_select %p204, %s203, 1999
    %s206 = smul.addr %s205, 16
    %s207 = scalar_lea.hbm %s1, %s206
    %s208 = scalar_lea.vmem [#allocation2], 10
    // Predicated region
    $region42: #{tpu_custom_call.1} parent=1 // pred_check
      _
    $region43: #{tpu_custom_call.1} parent=1 // pred_check_branch
      %210 = sbr.rel target = $region45
    $region44: #{tpu_custom_call.1} parent=1 // pred_region
      %211 = sst [smem:[#allocation10]] [#allocation31]
      %212 = sst [smem:[#allocation11]] [#allocation30]
    $region45: #{tpu_custom_call.1} parent=1 // pred_fallthru
      _
    %214 = shalt.err (0)
    %s216 = sshll.u32 %s208, 4
    %s217 = int_to_ptr.vmem [resolvable:$true] %s216
    %219 = dma.hbm_to_vmem [thread:$0]  %s207, 16, %s217, [#allocation3]
    %s220 = sld [smem:[#allocation5 + $0x182]]
    %p221 = scmp.gt.s32.totalorder %s220, 0
    %s222 = scalar_select %p221, %s220, 0
    %p223 = scmp.lt.s32.totalorder %s222, 1999
    %s224 = scalar_select %p223, %s222, 1999
    %s225 = smul.addr %s224, 16
    %s226 = scalar_lea.hbm %s1, %s225
    %s227 = scalar_lea.vmem [#allocation2], 11
    // Predicated region
    $region46: #{tpu_custom_call.1} parent=1 // pred_check
      _
    $region47: #{tpu_custom_call.1} parent=1 // pred_check_branch
      %229 = sbr.rel target = $region49
    $region48: #{tpu_custom_call.1} parent=1 // pred_region
      %230 = sst [smem:[#allocation10]] [#allocation33]
      %231 = sst [smem:[#allocation11]] [#allocation32]
    $region49: #{tpu_custom_call.1} parent=1 // pred_fallthru
      _
    %233 = shalt.err (0)
    %s235 = sshll.u32 %s227, 4
    %s236 = int_to_ptr.vmem [resolvable:$true] %s235
    %238 = dma.hbm_to_vmem [thread:$0]  %s226, 16, %s236, [#allocation3]
    %s239 = sld [smem:[#allocation5 + $0x3]]
    %p240 = scmp.gt.s32.totalorder %s239, 0
    %s241 = scalar_select %p240, %s239, 0
    %p242 = scmp.lt.s32.totalorder %s241, 1999
    %s243 = scalar_select %p242, %s241, 1999
    %s244 = smul.addr %s243, 16
    %s245 = scalar_lea.hbm %s1, %s244
    %s246 = scalar_lea.vmem [#allocation2], 12
    // Predicated region
    $region50: #{tpu_custom_call.1} parent=1 // pred_check
      _
    $region51: #{tpu_custom_call.1} parent=1 // pred_check_branch
      %248 = sbr.rel target = $region53
    $region52: #{tpu_custom_call.1} parent=1 // pred_region
      %249 = sst [smem:[#allocation10]] [#allocation35]
      %250 = sst [smem:[#allocation11]] [#allocation34]
    $region53: #{tpu_custom_call.1} parent=1 // pred_fallthru
      _
    %252 = shalt.err (0)
    %s254 = sshll.u32 %s246, 4
    %s255 = int_to_ptr.vmem [resolvable:$true] %s254
    %257 = dma.hbm_to_vmem [thread:$0]  %s245, 16, %s255, [#allocation3]
    %s258 = sld [smem:[#allocation5 + $0x83]]
    %p259 = scmp.gt.s32.totalorder %s258, 0
    %s260 = scalar_select %p259, %s258, 0
    %p261 = scmp.lt.s32.totalorder %s260, 1999
    %s262 = scalar_select %p261, %s260, 1999
    %s263 = smul.addr %s262, 16
    %s264 = scalar_lea.hbm %s1, %s263
    %s265 = scalar_lea.vmem [#allocation2], 13
    // Predicated region
    $region54: #{tpu_custom_call.1} parent=1 // pred_check
      _
    $region55: #{tpu_custom_call.1} parent=1 // pred_check_branch
      %267 = sbr.rel target = $region57
    $region56: #{tpu_custom_call.1} parent=1 // pred_region
      %268 = sst [smem:[#allocation10]] [#allocation37]
      %269 = sst [smem:[#allocation11]] [#allocation36]
    $region57: #{tpu_custom_call.1} parent=1 // pred_fallthru
      _
    %271 = shalt.err (0)
    %s273 = sshll.u32 %s265, 4
    %s274 = int_to_ptr.vmem [resolvable:$true] %s273
    %276 = dma.hbm_to_vmem [thread:$0]  %s264, 16, %s274, [#allocation3]
    %s277 = sld [smem:[#allocation5 + $0x103]]
    %p278 = scmp.gt.s32.totalorder %s277, 0
    %s279 = scalar_select %p278, %s277, 0
    %p280 = scmp.lt.s32.totalorder %s279, 1999
    %s281 = scalar_select %p280, %s279, 1999
    %s282 = smul.addr %s281, 16
    %s283 = scalar_lea.hbm %s1, %s282
    %s284 = scalar_lea.vmem [#allocation2], 14
    // Predicated region
    $region58: #{tpu_custom_call.1} parent=1 // pred_check
      _
    $region59: #{tpu_custom_call.1} parent=1 // pred_check_branch
      %286 = sbr.rel target = $region61
    $region60: #{tpu_custom_call.1} parent=1 // pred_region
      %287 = sst [smem:[#allocation10]] [#allocation39]
      %288 = sst [smem:[#allocation11]] [#allocation38]
    $region61: #{tpu_custom_call.1} parent=1 // pred_fallthru
      _
    %290 = shalt.err (0)
    %s292 = sshll.u32 %s284, 4
    %s293 = int_to_ptr.vmem [resolvable:$true] %s292
    %295 = dma.hbm_to_vmem [thread:$0]  %s283, 16, %s293, [#allocation3]
    %s296 = sld [smem:[#allocation5 + $0x183]]
    %p297 = scmp.gt.s32.totalorder %s296, 0
    %s298 = scalar_select %p297, %s296, 0
    %p299 = scmp.lt.s32.totalorder %s298, 1999
    %s300 = scalar_select %p299, %s298, 1999
    %s301 = smul.addr %s300, 16
    %s302 = scalar_lea.hbm %s1, %s301
    %s303 = scalar_lea.vmem [#allocation2], 15
    // Predicated region
    $region62: #{tpu_custom_call.1} parent=1 // pred_check
      _
    $region63: #{tpu_custom_call.1} parent=1 // pred_check_branch
      %305 = sbr.rel target = $region65
    $region64: #{tpu_custom_call.1} parent=1 // pred_region
      %306 = sst [smem:[#allocation10]] [#allocation41]
      %307 = sst [smem:[#allocation11]] [#allocation40]
    $region65: #{tpu_custom_call.1} parent=1 // pred_fallthru
      _
    %309 = shalt.err (0)
    %s311 = sshll.u32 %s303, 4
    %s312 = int_to_ptr.vmem [resolvable:$true] %s311
    %314 = dma.hbm_to_vmem [thread:$0]  %s302, 16, %s312, [#allocation3]
    %s315 = sld [smem:[#allocation5 + $0x4]]
    %p316 = scmp.gt.s32.totalorder %s315, 0
    %s317 = scalar_select %p316, %s315, 0
    %p318 = scmp.lt.s32.totalorder %s317, 1999
    %s319 = scalar_select %p318, %s317, 1999
    %s320 = smul.addr %s319, 16
    %s321 = scalar_lea.hbm %s1, %s320
    %s322 = scalar_lea.vmem [#allocation2], 16
    // Predicated region
    $region66: #{tpu_custom_call.1} parent=1 // pred_check
      _
    $region67: #{tpu_custom_call.1} parent=1 // pred_check_branch
      %324 = sbr.rel target = $region69
    $region68: #{tpu_custom_call.1} parent=1 // pred_region
      %325 = sst [smem:[#allocation10]] [#allocation43]
      %326 = sst [smem:[#allocation11]] [#allocation42]
    $region69: #{tpu_custom_call.1} parent=1 // pred_fallthru
      _
    %328 = shalt.err (0)
    %s330 = sshll.u32 %s322, 4
    %s331 = int_to_ptr.vmem [resolvable:$true] %s330
    %333 = dma.hbm_to_vmem [thread:$0]  %s321, 16, %s331, [#allocation3]
    %s334 = sld [smem:[#allocation5 + $0x84]]
    %p335 = scmp.gt.s32.totalorder %s334, 0
    %s336 = scalar_select %p335, %s334, 0
    %p337 = scmp.lt.s32.totalorder %s336, 1999
    %s338 = scalar_select %p337, %s336, 1999
    %s339 = smul.addr %s338, 16
    %s340 = scalar_lea.hbm %s1, %s339
    %s341 = scalar_lea.vmem [#allocation2], 17
    // Predicated region
    $region70: #{tpu_custom_call.1} parent=1 // pred_check
      _
    $region71: #{tpu_custom_call.1} parent=1 // pred_check_branch
      %343 = sbr.rel target = $region73
    $region72: #{tpu_custom_call.1} parent=1 // pred_region
      %344 = sst [smem:[#allocation10]] [#allocation45]
      %345 = sst [smem:[#allocation11]] [#allocation44]
    $region73: #{tpu_custom_call.1} parent=1 // pred_fallthru
      _
    %347 = shalt.err (0)
    %s349 = sshll.u32 %s341, 4
    %s350 = int_to_ptr.vmem [resolvable:$true] %s349
    %352 = dma.hbm_to_vmem [thread:$0]  %s340, 16, %s350, [#allocation3]
    %s353 = sld [smem:[#allocation5 + $0x104]]
    %p354 = scmp.gt.s32.totalorder %s353, 0
    %s355 = scalar_select %p354, %s353, 0
    %p356 = scmp.lt.s32.totalorder %s355, 1999
    %s357 = scalar_select %p356, %s355, 1999
    %s358 = smul.addr %s357, 16
    %s359 = scalar_lea.hbm %s1, %s358
    %s360 = scalar_lea.vmem [#allocation2], 18
    // Predicated region
    $region74: #{tpu_custom_call.1} parent=1 // pred_check
      _
    $region75: #{tpu_custom_call.1} parent=1 // pred_check_branch
      %362 = sbr.rel target = $region77
    $region76: #{tpu_custom_call.1} parent=1 // pred_region
      %363 = sst [smem:[#allocation10]] [#allocation47]
      %364 = sst [smem:[#allocation11]] [#allocation46]
    $region77: #{tpu_custom_call.1} parent=1 // pred_fallthru
      _
    %366 = shalt.err (0)
    %s368 = sshll.u32 %s360, 4
    %s369 = int_to_ptr.vmem [resolvable:$true] %s368
    %371 = dma.hbm_to_vmem [thread:$0]  %s359, 16, %s369, [#allocation3]
    %s372 = sld [smem:[#allocation5 + $0x184]]
    %p373 = scmp.gt.s32.totalorder %s372, 0
    %s374 = scalar_select %p373, %s372, 0
    %p375 = scmp.lt.s32.totalorder %s374, 1999
    %s376 = scalar_select %p375, %s374, 1999
    %s377 = smul.addr %s376, 16
    %s378 = scalar_lea.hbm %s1, %s377
    %s379 = scalar_lea.vmem [#allocation2], 19
    // Predicated region
    $region78: #{tpu_custom_call.1} parent=1 // pred_check
      _
    $region79: #{tpu_custom_call.1} parent=1 // pred_check_branch
      %381 = sbr.rel target = $region81
    $region80: #{tpu_custom_call.1} parent=1 // pred_region
      %382 = sst [smem:[#allocation10]] [#allocation49]
      %383 = sst [smem:[#allocation11]] [#allocation48]
    $region81: #{tpu_custom_call.1} parent=1 // pred_fallthru
      _
    %385 = shalt.err (0)
    %s387 = sshll.u32 %s379, 4
    %s388 = int_to_ptr.vmem [resolvable:$true] %s387
    %390 = dma.hbm_to_vmem [thread:$0]  %s378, 16, %s388, [#allocation3]
    %s391 = sld [smem:[#allocation5 + $0x5]]
    %p392 = scmp.gt.s32.totalorder %s391, 0
    %s393 = scalar_select %p392, %s391, 0
    %p394 = scmp.lt.s32.totalorder %s393, 1999
    %s395 = scalar_select %p394, %s393, 1999
    %s396 = smul.addr %s395, 16
    %s397 = scalar_lea.hbm %s1, %s396
    %s398 = scalar_lea.vmem [#allocation2], 20
    // Predicated region
    $region82: #{tpu_custom_call.1} parent=1 // pred_check
      _
    $region83: #{tpu_custom_call.1} parent=1 // pred_check_branch
      %400 = sbr.rel target = $region85
    $region84: #{tpu_custom_call.1} parent=1 // pred_region
      %401 = sst [smem:[#allocation10]] [#allocation51]
      %402 = sst [smem:[#allocation11]] [#allocation50]
    $region85: #{tpu_custom_call.1} parent=1 // pred_fallthru
      _
    %404 = shalt.err (0)
    %s406 = sshll.u32 %s398, 4
    %s407 = int_to_ptr.vmem [resolvable:$true] %s406
    %409 = dma.hbm_to_vmem [thread:$0]  %s397, 16, %s407, [#allocation3]
    %s410 = sld [smem:[#allocation5 + $0x85]]
    %p411 = scmp.gt.s32.totalorder %s410, 0
    %s412 = scalar_select %p411, %s410, 0
    %p413 = scmp.lt.s32.totalorder %s412, 1999
    %s414 = scalar_select %p413, %s412, 1999
    %s415 = smul.addr %s414, 16
    %s416 = scalar_lea.hbm %s1, %s415
    %s417 = scalar_lea.vmem [#allocation2], 21
    // Predicated region
    $region86: #{tpu_custom_call.1} parent=1 // pred_check
      _
    $region87: #{tpu_custom_call.1} parent=1 // pred_check_branch
      %419 = sbr.rel target = $region89
    $region88: #{tpu_custom_call.1} parent=1 // pred_region
      %420 = sst [smem:[#allocation10]] [#allocation53]
      %421 = sst [smem:[#allocation11]] [#allocation52]
    $region89: #{tpu_custom_call.1} parent=1 // pred_fallthru
      _
    %423 = shalt.err (0)
    %s425 = sshll.u32 %s417, 4
    %s426 = int_to_ptr.vmem [resolvable:$true] %s425
    %428 = dma.hbm_to_vmem [thread:$0]  %s416, 16, %s426, [#allocation3]
    %s429 = sld [smem:[#allocation5 + $0x105]]
    %p430 = scmp.gt.s32.totalorder %s429, 0
    %s431 = scalar_select %p430, %s429, 0
    %p432 = scmp.lt.s32.totalorder %s431, 1999
    %s433 = scalar_select %p432, %s431, 1999
    %s434 = smul.addr %s433, 16
    %s435 = scalar_lea.hbm %s1, %s434
    %s436 = scalar_lea.vmem [#allocation2], 22
    // Predicated region
    $region90: #{tpu_custom_call.1} parent=1 // pred_check
      _
    $region91: #{tpu_custom_call.1} parent=1 // pred_check_branch
      %438 = sbr.rel target = $region93
    $region92: #{tpu_custom_call.1} parent=1 // pred_region
      %439 = sst [smem:[#allocation10]] [#allocation55]
      %440 = sst [smem:[#allocation11]] [#allocation54]
    $region93: #{tpu_custom_call.1} parent=1 // pred_fallthru
      _
    %442 = shalt.err (0)
    %s444 = sshll.u32 %s436, 4
    %s445 = int_to_ptr.vmem [resolvable:$true] %s444
    %447 = dma.hbm_to_vmem [thread:$0]  %s435, 16, %s445, [#allocation3]
    %s448 = sld [smem:[#allocation5 + $0x185]]
    %p449 = scmp.gt.s32.totalorder %s448, 0
    %s450 = scalar_select %p449, %s448, 0
    %p451 = scmp.lt.s32.totalorder %s450, 1999
    %s452 = scalar_select %p451, %s450, 1999
    %s453 = smul.addr %s452, 16
    %s454 = scalar_lea.hbm %s1, %s453
    %s455 = scalar_lea.vmem [#allocation2], 23
    // Predicated region
    $region94: #{tpu_custom_call.1} parent=1 // pred_check
      _
    $region95: #{tpu_custom_call.1} parent=1 // pred_check_branch
      %457 = sbr.rel target = $region97
    $region96: #{tpu_custom_call.1} parent=1 // pred_region
      %458 = sst [smem:[#allocation10]] [#allocation57]
      %459 = sst [smem:[#allocation11]] [#allocation56]
    $region97: #{tpu_custom_call.1} parent=1 // pred_fallthru
      _
    %461 = shalt.err (0)
    %s463 = sshll.u32 %s455, 4
    %s464 = int_to_ptr.vmem [resolvable:$true] %s463
    %466 = dma.hbm_to_vmem [thread:$0]  %s454, 16, %s464, [#allocation3]
    %s467 = sld [smem:[#allocation5 + $0x6]]
    %p468 = scmp.gt.s32.totalorder %s467, 0
    %s469 = scalar_select %p468, %s467, 0
    %p470 = scmp.lt.s32.totalorder %s469, 1999
    %s471 = scalar_select %p470, %s469, 1999
    %s472 = smul.addr %s471, 16
    %s473 = scalar_lea.hbm %s1, %s472
    %s474 = scalar_lea.vmem [#allocation2], 24
    // Predicated region
    $region98: #{tpu_custom_call.1} parent=1 // pred_check
      _
    $region99: #{tpu_custom_call.1} parent=1 // pred_check_branch
      %476 = sbr.rel target = $region101
    $region100: #{tpu_custom_call.1} parent=1 // pred_region
      %477 = sst [smem:[#allocation10]] [#allocation59]
      %478 = sst [smem:[#allocation11]] [#allocation58]
    $region101: #{tpu_custom_call.1} parent=1 // pred_fallthru
      _
    %480 = shalt.err (0)
    %s482 = sshll.u32 %s474, 4
    %s483 = int_to_ptr.vmem [resolvable:$true] %s482
    %485 = dma.hbm_to_vmem [thread:$0]  %s473, 16, %s483, [#allocation3]
    %s486 = sld [smem:[#allocation5 + $0x86]]
    %p487 = scmp.gt.s32.totalorder %s486, 0
    %s488 = scalar_select %p487, %s486, 0
    %p489 = scmp.lt.s32.totalorder %s488, 1999
    %s490 = scalar_select %p489, %s488, 1999
    %s491 = smul.addr %s490, 16
    %s492 = scalar_lea.hbm %s1, %s491
    %s493 = scalar_lea.vmem [#allocation2], 25
    // Predicated region
    $region102: #{tpu_custom_call.1} parent=1 // pred_check
      _
    $region103: #{tpu_custom_call.1} parent=1 // pred_check_branch
      %495 = sbr.rel target = $region105
    $region104: #{tpu_custom_call.1} parent=1 // pred_region
      %496 = sst [smem:[#allocation10]] [#allocation61]
      %497 = sst [smem:[#allocation11]] [#allocation60]
    $region105: #{tpu_custom_call.1} parent=1 // pred_fallthru
      _
    %499 = shalt.err (0)
    %s501 = sshll.u32 %s493, 4
    %s502 = int_to_ptr.vmem [resolvable:$true] %s501
    %504 = dma.hbm_to_vmem [thread:$0]  %s492, 16, %s502, [#allocation3]
    %s505 = sld [smem:[#allocation5 + $0x106]]
    %p506 = scmp.gt.s32.totalorder %s505, 0
    %s507 = scalar_select %p506, %s505, 0
    %p508 = scmp.lt.s32.totalorder %s507, 1999
    %s509 = scalar_select %p508, %s507, 1999
    %s510 = smul.addr %s509, 16
    %s511 = scalar_lea.hbm %s1, %s510
    %s512 = scalar_lea.vmem [#allocation2], 26
    // Predicated region
    $region106: #{tpu_custom_call.1} parent=1 // pred_check
      _
    $region107: #{tpu_custom_call.1} parent=1 // pred_check_branch
      %514 = sbr.rel target = $region109
    $region108: #{tpu_custom_call.1} parent=1 // pred_region
      %515 = sst [smem:[#allocation10]] [#allocation63]
      %516 = sst [smem:[#allocation11]] [#allocation62]
    $region109: #{tpu_custom_call.1} parent=1 // pred_fallthru
      _
    %518 = shalt.err (0)
    %s520 = sshll.u32 %s512, 4
    %s521 = int_to_ptr.vmem [resolvable:$true] %s520
    %523 = dma.hbm_to_vmem [thread:$0]  %s511, 16, %s521, [#allocation3]
    %s524 = sld [smem:[#allocation5 + $0x186]]
    %p525 = scmp.gt.s32.totalorder %s524, 0
    %s526 = scalar_select %p525, %s524, 0
    %p527 = scmp.lt.s32.totalorder %s526, 1999
    %s528 = scalar_select %p527, %s526, 1999
    %s529 = smul.addr %s528, 16
    %s530 = scalar_lea.hbm %s1, %s529
    %s531 = scalar_lea.vmem [#allocation2], 27
    // Predicated region
    $region110: #{tpu_custom_call.1} parent=1 // pred_check
      _
    $region111: #{tpu_custom_call.1} parent=1 // pred_check_branch
      %533 = sbr.rel target = $region113
    $region112: #{tpu_custom_call.1} parent=1 // pred_region
      %534 = sst [smem:[#allocation10]] [#allocation65]
      %535 = sst [smem:[#allocation11]] [#allocation64]
    $region113: #{tpu_custom_call.1} parent=1 // pred_fallthru
      _
    %537 = shalt.err (0)
    %s539 = sshll.u32 %s531, 4
    %s540 = int_to_ptr.vmem [resolvable:$true] %s539
    %542 = dma.hbm_to_vmem [thread:$0]  %s530, 16, %s540, [#allocation3]
    %s543 = sld [smem:[#allocation5 + $0x7]]
    %p544 = scmp.gt.s32.totalorder %s543, 0
    %s545 = scalar_select %p544, %s543, 0
    %p546 = scmp.lt.s32.totalorder %s545, 1999
    %s547 = scalar_select %p546, %s545, 1999
    %s548 = smul.addr %s547, 16
    %s549 = scalar_lea.hbm %s1, %s548
    %s550 = scalar_lea.vmem [#allocation2], 28
    // Predicated region
    $region114: #{tpu_custom_call.1} parent=1 // pred_check
      _
    $region115: #{tpu_custom_call.1} parent=1 // pred_check_branch
      %552 = sbr.rel target = $region117
    $region116: #{tpu_custom_call.1} parent=1 // pred_region
      %553 = sst [smem:[#allocation10]] [#allocation67]
      %554 = sst [smem:[#allocation11]] [#allocation66]
    $region117: #{tpu_custom_call.1} parent=1 // pred_fallthru
      _
    %556 = shalt.err (0)
    %s558 = sshll.u32 %s550, 4
    %s559 = int_to_ptr.vmem [resolvable:$true] %s558
    %561 = dma.hbm_to_vmem [thread:$0]  %s549, 16, %s559, [#allocation3]
    %s562 = sld [smem:[#allocation5 + $0x87]]
    %p563 = scmp.gt.s32.totalorder %s562, 0
    %s564 = scalar_select %p563, %s562, 0
    %p565 = scmp.lt.s32.totalorder %s564, 1999
    %s566 = scalar_select %p565, %s564, 1999
    %s567 = smul.addr %s566, 16
    %s568 = scalar_lea.hbm %s1, %s567
    %s569 = scalar_lea.vmem [#allocation2], 29
    // Predicated region
    $region118: #{tpu_custom_call.1} parent=1 // pred_check
      _
    $region119: #{tpu_custom_call.1} parent=1 // pred_check_branch
      %571 = sbr.rel target = $region121
    $region120: #{tpu_custom_call.1} parent=1 // pred_region
      %572 = sst [smem:[#allocation10]] [#allocation69]
      %573 = sst [smem:[#allocation11]] [#allocation68]
    $region121: #{tpu_custom_call.1} parent=1 // pred_fallthru
      _
    %575 = shalt.err (0)
    %s577 = sshll.u32 %s569, 4
    %s578 = int_to_ptr.vmem [resolvable:$true] %s577
    %580 = dma.hbm_to_vmem [thread:$0]  %s568, 16, %s578, [#allocation3]
    %s581 = sld [smem:[#allocation5 + $0x107]]
    %p582 = scmp.gt.s32.totalorder %s581, 0
    %s583 = scalar_select %p582, %s581, 0
    %p584 = scmp.lt.s32.totalorder %s583, 1999
    %s585 = scalar_select %p584, %s583, 1999
    %s586 = smul.addr %s585, 16
    %s587 = scalar_lea.hbm %s1, %s586
    %s588 = scalar_lea.vmem [#allocation2], 30
    // Predicated region
    $region122: #{tpu_custom_call.1} parent=1 // pred_check
      _
    $region123: #{tpu_custom_call.1} parent=1 // pred_check_branch
      %590 = sbr.rel target = $region125
    $region124: #{tpu_custom_call.1} parent=1 // pred_region
      %591 = sst [smem:[#allocation10]] [#allocation71]
      %592 = sst [smem:[#allocation11]] [#allocation70]
    $region125: #{tpu_custom_call.1} parent=1 // pred_fallthru
      _
    %594 = shalt.err (0)
    %s596 = sshll.u32 %s588, 4
    %s597 = int_to_ptr.vmem [resolvable:$true] %s596
    %599 = dma.hbm_to_vmem [thread:$0]  %s587, 16, %s597, [#allocation3]
    %s600 = sld [smem:[#allocation5 + $0x187]]
    %p601 = scmp.gt.s32.totalorder %s600, 0
    %s602 = scalar_select %p601, %s600, 0
    %p603 = scmp.lt.s32.totalorder %s602, 1999
    %s604 = scalar_select %p603, %s602, 1999
    %s605 = smul.addr %s604, 16
    %s606 = scalar_lea.hbm %s1, %s605
    %s607 = scalar_lea.vmem [#allocation2], 31
    // Predicated region
    $region126: #{tpu_custom_call.1} parent=1 // pred_check
      _
    $region127: #{tpu_custom_call.1} parent=1 // pred_check_branch
      %609 = sbr.rel target = $region129
    $region128: #{tpu_custom_call.1} parent=1 // pred_region
      %610 = sst [smem:[#allocation10]] [#allocation73]
      %611 = sst [smem:[#allocation11]] [#allocation72]
    $region129: #{tpu_custom_call.1} parent=1 // pred_fallthru
      _
    %613 = shalt.err (0)
    %s615 = sshll.u32 %s607, 4
    %s616 = int_to_ptr.vmem [resolvable:$true] %s615
    %618 = dma.hbm_to_vmem [thread:$0]  %s606, 16, %s616, [#allocation3]
    %s619 = smul.u32 1, 1
    %s620 = sshll.u32 %s619, 4
    %621 = dma.done [#allocation3], %s620
    %s622 = sshll.u32 %s619, 4
    %623 = dma.done [#allocation3], %s622
    %s624 = sshll.u32 %s619, 4
    %625 = dma.done [#allocation3], %s624
    %s626 = sshll.u32 %s619, 4
    %627 = dma.done [#allocation3], %s626
    %s628 = sshll.u32 %s619, 4
    %629 = dma.done [#allocation3], %s628
    %s630 = sshll.u32 %s619, 4
    %631 = dma.done [#allocation3], %s630
    %s632 = sshll.u32 %s619, 4
    %633 = dma.done [#allocation3], %s632
    %s634 = sshll.u32 %s619, 4
    %635 = dma.done [#allocation3], %s634
    %s636 = sshll.u32 %s619, 4
    %637 = dma.done [#allocation3], %s636
    %s638 = sshll.u32 %s619, 4
    %639 = dma.done [#allocation3], %s638
    %s640 = sshll.u32 %s619, 4
    %641 = dma.done [#allocation3], %s640
    %s642 = sshll.u32 %s619, 4
    %643 = dma.done [#allocation3], %s642
    %s644 = sshll.u32 %s619, 4
    %645 = dma.done [#allocation3], %s644
    %s646 = sshll.u32 %s619, 4
    %647 = dma.done [#allocation3], %s646
    %s648 = sshll.u32 %s619, 4
    %649 = dma.done [#allocation3], %s648
    %s650 = sshll.u32 %s619, 4
    %651 = dma.done [#allocation3], %s650
    %s652 = sshll.u32 %s619, 4
    %653 = dma.done [#allocation3], %s652
    %s654 = sshll.u32 %s619, 4
    %655 = dma.done [#allocation3], %s654
    %s656 = sshll.u32 %s619, 4
    %657 = dma.done [#allocation3], %s656
    %s658 = sshll.u32 %s619, 4
    %659 = dma.done [#allocation3], %s658
    %s660 = sshll.u32 %s619, 4
    %661 = dma.done [#allocation3], %s660
    %s662 = sshll.u32 %s619, 4
    %663 = dma.done [#allocation3], %s662
    %s664 = sshll.u32 %s619, 4
    %665 = dma.done [#allocation3], %s664
    %s666 = sshll.u32 %s619, 4
    %667 = dma.done [#allocation3], %s666
    %s668 = sshll.u32 %s619, 4
    %669 = dma.done [#allocation3], %s668
    %s670 = sshll.u32 %s619, 4
    %671 = dma.done [#allocation3], %s670
    %s672 = sshll.u32 %s619, 4
    %673 = dma.done [#allocation3], %s672
    %s674 = sshll.u32 %s619, 4
    %675 = dma.done [#allocation3], %s674
    %s676 = sshll.u32 %s619, 4
    %677 = dma.done [#allocation3], %s676
    %s678 = sshll.u32 %s619, 4
    %679 = dma.done [#allocation3], %s678
    %s680 = sshll.u32 %s619, 4
    %681 = dma.done [#allocation3], %s680
    %s682 = sshll.u32 %s619, 4
    %683 = dma.done [#allocation3], %s682
    %v684 = vld [vmem:[#allocation2] sm:$0xf]
    %v685 = vld [vmem:[%s94] sm:$0xf]
    %v686 = vadd.f32 %v684, %v685
    %v687 = vld [vmem:[%s170] sm:$0xf]
    %v688 = vadd.f32 %v686, %v687
    %v689 = vld [vmem:[%s246] sm:$0xf]
    %v690 = vadd.f32 %v688, %v689
    %v691 = vld [vmem:[%s322] sm:$0xf]
    %v692 = vadd.f32 %v690, %v691
    %v693 = vld [vmem:[%s398] sm:$0xf]
    %v694 = vadd.f32 %v692, %v693
    %v695 = vld [vmem:[%s474] sm:$0xf]
    %v696 = vadd.f32 %v694, %v695
    %v697 = vld [vmem:[%s550] sm:$0xf]
    %v698 = vadd.f32 %v696, %v697
    %v699 = vmul.f32 %v698, 0.125
    %700 = vst [vmem:[#allocation6] sm:$0xf] %v699
    // Predicated region
    $region130: #{tpu_custom_call.1} parent=1 // pred_check
      _
    $region131: #{tpu_custom_call.1} parent=1 // pred_check_branch
      %702 = sbr.rel (0) target = $region133
    $region132: #{tpu_custom_call.1} parent=1 // pred_region
      %s704 = ssub.s32 64, 64
      %705 = vsyncadd [#allocation7], %s704
      %s707 = sshll.u32 [#allocation6], 4
      %s708 = int_to_ptr.vmem [resolvable:$true] %s707
      %710 = dma.vmem_to_hbm [thread:$0]  %s708, 64, %s2, [#allocation7]
    $region133: #{tpu_custom_call.1} parent=1 // pred_fallthru
      _
    // Predicated region
    $region134: #{tpu_custom_call.1} parent=1 // pred_check
      _
    $region135: #{tpu_custom_call.1} parent=1 // pred_check_branch
      %712 = sbr.rel (0) target = $region137
    $region136: #{tpu_custom_call.1} parent=1 // pred_region
      %713 = dma.done [#allocation7], 64
    $region137: #{tpu_custom_call.1} parent=1 // pred_fallthru
      _
    %714 = vsyncpa [#allocation7], 1
  %715 = vsyncmov [#allocation3]
  %s716 = vpop.sfrf %715
  %p717 = scmp.eq.s32.totalorder %s716, 0
  %p718 = pneg %p717
  %720 = shalt.err (%p718)

</llo_original>
